<compile_context>
chip_gen: v7x
topology: tpu7x:2x2x1
jax: 0.10.0
libtpu: 0.0.40
codegen_flags: <defaults>
</compile_context>

<pallas_src>
import math
import jax
import jax.numpy as jnp
from jax.experimental import pallas as pl
from jax.experimental.pallas import tpu as pltpu


_MIN_TILE_M = 8


# --------------------------------------------------------------------------- #
# Math helpers
# --------------------------------------------------------------------------- #

def _gelu_tanh(x):
    # Exactly mirrors the PyTorch GELU module (tanh approximation), in f32.
    c = math.sqrt(2.0 / math.pi)
    return 0.5 * x * (1.0 + jnp.tanh(c * (x + 0.044715 * x * x * x)))


# --------------------------------------------------------------------------- #
# Kernels
# --------------------------------------------------------------------------- #

def _ffn_resident_kernel(x_ref, w1_ref, b1_ref, w2_ref, b2_ref, o_ref):
    """Weights fully VMEM-resident; full hidden dim per M tile; grid=(M_tiles,)."""
    h = jnp.dot(x_ref[...], w1_ref[...], preferred_element_type=jnp.float32)
    h = _gelu_tanh(h + b1_ref[...].astype(jnp.float32))
    y = jnp.dot(h.astype(w2_ref.dtype), w2_ref[...],
                preferred_element_type=jnp.float32)
    o_ref[...] = (y + b2_ref[...].astype(jnp.float32)).astype(o_ref.dtype)


def _ffn_stream_kernel_f32out(x_ref, w1_ref, b1_ref, w2_ref, b2_ref, o_ref):
    """Streaming H panels; f32 output -> accumulate directly into o_ref (no scratch)."""
    h_idx = pl.program_id(1)
    th = w1_ref.shape[1]  # static block width

    @pl.when(h_idx == 0)
    def _init():
        o_ref[...] = jnp.zeros_like(o_ref)

    h = jnp.dot(x_ref[...], w1_ref[...], preferred_element_type=jnp.float32)
    off = pl.multiple_of(h_idx * th, th)
    h = _gelu_tanh(h + b1_ref[:, pl.ds(off, th)].astype(jnp.float32))
    o_ref[...] += jnp.dot(h.astype(w2_ref.dtype), w2_ref[...],
                          preferred_element_type=jnp.float32)

    @pl.when(h_idx == pl.num_programs(1) - 1)
    def _finalize():
        o_ref[...] += b2_ref[...].astype(jnp.float32)


def _ffn_stream_kernel_acc(x_ref, w1_ref, b1_ref, w2_ref, b2_ref, o_ref, acc_ref):
    """Streaming H panels; non-f32 output -> f32 VMEM scratch accumulator."""
    h_idx = pl.program_id(1)
    th = w1_ref.shape[1]

    @pl.when(h_idx == 0)
    def _init():
        acc_ref[...] = jnp.zeros_like(acc_ref)

    h = jnp.dot(x_ref[...], w1_ref[...], preferred_element_type=jnp.float32)
    off = pl.multiple_of(h_idx * th, th)
    h = _gelu_tanh(h + b1_ref[:, pl.ds(off, th)].astype(jnp.float32))
    acc_ref[...] += jnp.dot(h.astype(w2_ref.dtype), w2_ref[...],
                            preferred_element_type=jnp.float32)

    @pl.when(h_idx == pl.num_programs(1) - 1)
    def _finalize():
        o_ref[...] = (acc_ref[...] + b2_ref[...].astype(jnp.float32)).astype(o_ref.dtype)


# --------------------------------------------------------------------------- #
# Planning (tile sizes, path selection, VMEM bookkeeping)
# --------------------------------------------------------------------------- #

def _round_up(x, m):
    return ((x + m - 1) // m) * m


def _vmem_capacity_bytes():
    try:
        info = pltpu.get_tpu_info()
        cap = getattr(info, "vmem_capacity_bytes", None)
        if cap:
            return int(cap)
    except Exception:
        pass
    return 64 << 20  # conservative fallback (v7x has the smallest per-TC VMEM)


def _tm_candidates(m, tm_target, ensure_two):
    """Row-tile candidates, descending, multiples of 8, capped so >=2 M tiles."""
    max_tm = _round_up(m, _MIN_TILE_M)
    if ensure_two and m > _MIN_TILE_M:
        max_tm = min(max_tm, _round_up(pl.cdiv(m, 2), _MIN_TILE_M))
    tgt = max(_MIN_TILE_M, (int(tm_target) // _MIN_TILE_M) * _MIN_TILE_M)
    base = [1024, 768, 512, 384, 256, 192, 128, 64, 32, 16, 8]
    cands = sorted({min(v, max_tm) for v in ([tgt] + base)}, reverse=True)
    cands = [c for c in cands if c >= _MIN_TILE_M]
    return cands or [_MIN_TILE_M]


def _th_candidates(h, th_target):
    """Hidden-panel widths dividing H; prefer multiples of 256, then 128."""
    cands = []
    for step in (256, 128):
        t = min((int(th_target) // step) * step, (h // step) * step)
        while t >= step:
            if h % t == 0 and t not in cands:
                cands.append(t)
            t -= step
    if not cands:
        cands = [h]  # no 128-aligned divisor: single full-width panel
    return cands


def _resident_vmem_bytes(tm, d, h, xb, wb, ob):
    return (2 * tm * d * xb                         # x tiles (double-buffered)
            + 2 * tm * d * ob                       # out tiles
            + 2 * (d * h + h * d) * wb              # W1 + W2 (conservative: x2)
            + 2 * (h + d) * wb                      # biases
            + tm * h * 4                            # f32 hidden intermediate
            + (tm * h * wb if wb != 4 else 0)       # cast copy for 2nd matmul
            + tm * d * 4)                           # f32 result before cast


def _stream_vmem_bytes(tm, th, d, h, xb, wb, ob):
    return (2 * tm * d * xb                         # x tiles
            + 2 * tm * d * ob                       # out tiles
            + 2 * d * th * wb                       # W1 column panels
            + 2 * th * d * wb                       # W2 row panels
            + 2 * h * wb + 2 * d * wb               # full b1 (resident) + b2
            + tm * th * 4                           # f32 GELU intermediate
            + (tm * th * wb if wb != 4 else 0)      # cast copy for 2nd matmul
            + tm * d * 4)                           # accumulator / resident f32 out


def _plan(m, d, h, xb, wb, ob, budget, small_vmem,
          tm_target, th_target, force_streaming):
    ensure_two = m > _MIN_TILE_M

    # 1) Weights-resident fast path.
    if not force_streaming:
        res_tgt = tm_target if tm_target is not None else 512
        res_cands = _tm_candidates(m, res_tgt, ensure_two)
        min_res_tm = min(128, res_cands[0])
        for tm in res_cands:
            if tm < min_res_tm:
                break
            if _resident_vmem_bytes(tm, d, h, xb, wb, ob) <= budget:
                return tm, None, True

    # 2) Streaming path: roofline-derived TM per generation / dtype.
    if tm_target is None:
        if wb <= 2:
            tm_target = 384 if small_vmem else 768
        else:
            tm_target = 768 if small_vmem else 1024
    if th_target is None:
        th_target = 1024 if small_vmem else 2048

    tm_cands = _tm_candidates(m, tm_target, ensure_two)
    th_cands = _th_candidates(h, th_target)
    for tm in tm_cands:                 # prefer the largest TM (arithmetic intensity)
        for th in th_cands:             # then the widest preferred panel that fits
            if _stream_vmem_bytes(tm, th, d, h, xb, wb, ob) <= budget:
                return tm, th, False
    return tm_cands[-1], th_cands[-1], False


# --------------------------------------------------------------------------- #
# Wrapper
# --------------------------------------------------------------------------- #

def feedforward(x, w1, b1, w2, b2, *, tm_target=None, th_target=None,
                force_streaming=False):
    """x: [batch, seq, emb_dim] -> [batch, seq, emb_dim]; y = GELU(x@W1+b1)@W2+b2."""
    B, S, D = x.shape
    Din, H = w1.shape
    assert Din == D and w2.shape == (H, D)
    assert b1.shape == (H,) and b2.shape == (D,)
    M = B * S

    xb = x.dtype.itemsize
    wb = w1.dtype.itemsize
    ob = x.dtype.itemsize

    vmem_cap = _vmem_capacity_bytes()
    # v5e/v6e: 128 MiB per-core VMEM -> allow ~100 MiB; v7x: 64 MiB -> cap at 48 MiB.
    if vmem_cap >= (100 << 20):
        vmem_limit = 100 << 20
        small_vmem = False
    else:
        vmem_limit = 48 << 20
        small_vmem = True
    budget = int(vmem_limit * 0.80)

    TM, TH, resident = _plan(M, D, H, xb, wb, ob, budget, small_vmem,
                             tm_target, th_target, force_streaming)

    # Pad M so every M tile is full -> unmasked, lane-dense output stores.
    M_pad = _round_up(M, TM)
    x2d = x.reshape(M, D)
    if M_pad != M:
        x2d = jnp.pad(x2d, ((0, M_pad - M), (0, 0)))
    b1_2d = b1.reshape(1, H)
    b2_2d = b2.reshape(1, D)
    m_tiles = M_pad // TM
    out_dtype = x.dtype

    if resident:
        grid = (m_tiles,)
        in_specs = [
            pl.BlockSpec((TM, D), lambda i: (i, 0)),   # x rows
            pl.BlockSpec((D, H), lambda i: (0, 0)),    # W1 (DMA'd once)
            pl.BlockSpec((1, H), lambda i: (0, 0)),    # b1
            pl.BlockSpec((H, D), lambda i: (0, 0)),    # W2
            pl.BlockSpec((1, D), lambda i: (0, 0)),    # b2
        ]
        out_specs = pl.BlockSpec((TM, D), lambda i: (i, 0))
        scratch_shapes = []
        kernel = _ffn_resident_kernel
        dim_sem = ("parallel",)
        weight_reads = 1
        vmem_est = _resident_vmem_bytes(TM, D, H, xb, wb, ob)
    else:
        grid = (m_tiles, H // TH)
        in_specs = [
            pl.BlockSpec((TM, D), lambda i, hh: (i, 0)),   # x rows (const over H)
            pl.BlockSpec((D, TH), lambda i, hh: (0, hh)),  # W1 column panel
            pl.BlockSpec((1, H), lambda i, hh: (0, 0)),    # b1 resident; sliced in kernel
            pl.BlockSpec((TH, D), lambda i, hh: (hh, 0)),  # W2 row panel
            pl.BlockSpec((1, D), lambda i, hh: (0, 0)),    # b2
        ]
        out_specs = pl.BlockSpec((TM, D), lambda i, hh: (i, 0))
        if out_dtype == jnp.float32:
            kernel = _ffn_stream_kernel_f32out
            scratch_shapes = []
        else:
            kernel = _ffn_stream_kernel_acc
            scratch_shapes = [pltpu.VMEM((TM, D), jnp.float32)]
        dim_sem = ("parallel", "arbitrary")
        weight_reads = m_tiles
        vmem_est = _stream_vmem_bytes(TM, TH, D, H, xb, wb, ob)

    vmem_limit_bytes = int(min(max(int(vmem_est * 1.5) + (4 << 20), 16 << 20),
                               vmem_limit))

    cost = pl.CostEstimate(
        flops=4 * M_pad * D * H + 10 * M_pad * H,
        transcendentals=M_pad * H,
        bytes_accessed=(M_pad * D * xb + M_pad * D * ob
                        + weight_reads * (w1.size + w2.size) * wb
                        + (b1.size + b2.size) * wb),
    )

    out = pl.pallas_call(
        kernel,
        out_shape=jax.ShapeDtypeStruct((M_pad, D), out_dtype),
        grid_spec=pltpu.PrefetchScalarGridSpec(
            num_scalar_prefetch=0,
            grid=grid,
            in_specs=in_specs,
            out_specs=out_specs,
            scratch_shapes=scratch_shapes,
        ),
        compiler_params=pltpu.CompilerParams(
            dimension_semantics=dim_sem,
            vmem_limit_bytes=vmem_limit_bytes,
        ),
        cost_estimate=cost,
    )(x2d, w1, b1_2d, w2, b2_2d)

    if M_pad != M:
        out = out[:M]
    return out.reshape(B, S, D)


# --------------------------------------------------------------------------- #
# Reference / init / test
# --------------------------------------------------------------------------- #

def init_params(key, emb_dim, dtype=jnp.float32):
    """Deterministic init mimicking nn.Linear (uniform +/- 1/sqrt(fan_in))."""
    hidden = 4 * emb_dim
    k1, k2, k3, k4 = jax.random.split(key, 4)
    lim1 = 1.0 / math.sqrt(emb_dim)
    lim2 = 1.0 / math.sqrt(hidden)
    # stored as [in, out] so the kernel computes x @ W + b
    w1 = jax.random.uniform(k1, (emb_dim, hidden), jnp.float32, -lim1, lim1).astype(dtype)
    b1 = jax.random.uniform(k2, (hidden,), jnp.float32, -lim1, lim1).astype(dtype)
    w2 = jax.random.uniform(k3, (hidden, emb_dim), jnp.float32, -lim2, lim2).astype(dtype)
    b2 = jax.random.uniform(k4, (emb_dim,), jnp.float32, -lim2, lim2).astype(dtype)
    return w1, b1, w2, b2


def reference(x, w1, b1, w2, b2):
    xf = x.astype(jnp.float32)
    h = _gelu_tanh(xf @ w1.astype(jnp.float32) + b1.astype(jnp.float32))
    return (h @ w2.astype(jnp.float32) + b2.astype(jnp.float32)).astype(x.dtype)


if __name__ == "__main__":
    key = jax.random.PRNGKey(0)
    kx, kp = jax.random.split(key)

    # Small lane-dense config: emb_dim=128 (full-width vst), hidden=512, M=256 rows.
    batch, seq, emb_dim = 2, 128, 128
    x = jax.random.normal(kx, (batch, seq, emb_dim), jnp.float32)
    w1, b1, w2, b2 = init_params(kp, emb_dim)
    ref = reference(x, w1, b1, w2, b2)

    # 1) Auto path: weights easily fit VMEM -> weights-resident fast path, grid=(2,).
    out = jax.block_until_ready(feedforward(x, w1, b1, w2, b2))
    assert out.shape == (batch, seq, emb_dim)
    assert jnp.allclose(out, ref, atol=2e-4, rtol=2e-4), "resident path mismatch"

    # 2) Forced streaming path (2 M tiles x 2 H panels, f32 accumulate-into-output).
    out_s = jax.block_until_ready(
        feedforward(x, w1, b1, w2, b2, force_streaming=True,
                    tm_target=128, th_target=256))
    assert jnp.allclose(out_s, ref, atol=2e-4, rtol=2e-4), "streaming path mismatch"

    # 3) bf16 forced streaming (exercises the f32 scratch-accumulator finalize path).
    xb16 = x.astype(jnp.bfloat16)
    w1b, b1b, w2b, b2b = (a.astype(jnp.bfloat16) for a in (w1, b1, w2, b2))
    out_b = jax.block_until_ready(
        feedforward(xb16, w1b, b1b, w2b, b2b, force_streaming=True,
                    tm_target=128, th_target=256))
    ref_b = reference(xb16, w1b, b1b, w2b, b2b).astype(jnp.float32)
    assert jnp.allclose(out_b.astype(jnp.float32), ref_b, atol=3e-2, rtol=3e-2), \
        "bf16 streaming path mismatch"

    print("KERNEL_OK")
</pallas_src>

<mosaic_0001>
module attributes {stable_mosaic.version = 11 : i64} {
  func.func @_ffn_resident_kernel(%arg0: i32, %arg1: memref<128x128xf32, #tpu.memory_space<vmem>>, %arg2: memref<128x512xf32, #tpu.memory_space<vmem>>, %arg3: memref<1x512xf32, #tpu.memory_space<vmem>>, %arg4: memref<512x128xf32, #tpu.memory_space<vmem>>, %arg5: memref<1x128xf32, #tpu.memory_space<vmem>>, %arg6: memref<128x128xf32, #tpu.memory_space<vmem>>) attributes {dimension_semantics = [#tpu.dimension_semantics<parallel>], iteration_bounds = array<i64: 2>, scalar_prefetch = 0 : i64, scratch_operands = 0 : i64, tpu.core_type = #tpu.core_type<tc>, window_params = [{transform_indices = @transform_0, window_bounds = array<i64: 128, 128>}, {pipeline_mode = #tpu.pipeline_mode<synchronous>, transform_indices = @transform_1, window_bounds = array<i64: 128, 512>}, {pipeline_mode = #tpu.pipeline_mode<synchronous>, transform_indices = @transform_2, window_bounds = array<i64: 1, 512>}, {pipeline_mode = #tpu.pipeline_mode<synchronous>, transform_indices = @transform_3, window_bounds = array<i64: 512, 128>}, {pipeline_mode = #tpu.pipeline_mode<synchronous>, transform_indices = @transform_4, window_bounds = array<i64: 1, 128>}, {transform_indices = @transform_5, window_bounds = array<i64: 128, 128>}]} {
    %c0 = arith.constant 0 : index
    %c0_0 = arith.constant 0 : index
    %0 = vector.load %arg1[%c0, %c0_0] : memref<128x128xf32, #tpu.memory_space<vmem>>, vector<128x128xf32>
    %c0_1 = arith.constant 0 : index
    %c0_2 = arith.constant 0 : index
    %1 = vector.load %arg2[%c0_1, %c0_2] : memref<128x512xf32, #tpu.memory_space<vmem>>, vector<128x512xf32>
    %cst = arith.constant dense<0.000000e+00> : vector<128x512xf32>
    %2 = tpu.matmul %0, %1, %cst {dimension_numbers = #tpu.dot_dimension_numbers<[1], [0], [0], [1], [0, 0, 1, 1], [], []>} : vector<128x128xf32>, vector<128x512xf32>, vector<128x512xf32> -> vector<128x512xf32>
    %c0_3 = arith.constant 0 : index
    %c0_4 = arith.constant 0 : index
    %3 = vector.load %arg3[%c0_3, %c0_4] : memref<1x512xf32, #tpu.memory_space<vmem>>, vector<1x512xf32>
    %4 = vector.broadcast %3 : vector<1x512xf32> to vector<128x512xf32>
    %5 = arith.addf %2, %4 : vector<128x512xf32>
    %cst_5 = arith.constant 5.000000e-01 : f32
    %6 = vector.broadcast %cst_5 : f32 to vector<128x512xf32>
    %7 = arith.mulf %6, %5 : vector<128x512xf32>
    %cst_6 = arith.constant 4.471500e-02 : f32
    %8 = vector.broadcast %cst_6 : f32 to vector<128x512xf32>
    %9 = arith.mulf %8, %5 : vector<128x512xf32>
    %10 = arith.mulf %9, %5 : vector<128x512xf32>
    %11 = arith.mulf %10, %5 : vector<128x512xf32>
    %12 = arith.addf %5, %11 : vector<128x512xf32>
    %cst_7 = arith.constant 0.797884583 : f32
    %13 = vector.broadcast %cst_7 : f32 to vector<128x512xf32>
    %14 = arith.mulf %13, %12 : vector<128x512xf32>
    %15 = math.tanh %14 : vector<128x512xf32>
    %cst_8 = arith.constant 1.000000e+00 : f32
    %16 = vector.broadcast %cst_8 : f32 to vector<128x512xf32>
    %17 = arith.addf %16, %15 : vector<128x512xf32>
    %18 = arith.mulf %7, %17 : vector<128x512xf32>
    %c0_9 = arith.constant 0 : index
    %c0_10 = arith.constant 0 : index
    %19 = vector.load %arg4[%c0_9, %c0_10] : memref<512x128xf32, #tpu.memory_space<vmem>>, vector<512x128xf32>
    %cst_11 = arith.constant dense<0.000000e+00> : vector<128x128xf32>
    %20 = tpu.matmul %18, %19, %cst_11 {dimension_numbers = #tpu.dot_dimension_numbers<[1], [0], [0], [1], [0, 0, 1, 1], [], []>} : vector<128x512xf32>, vector<512x128xf32>, vector<128x128xf32> -> vector<128x128xf32>
    %c0_12 = arith.constant 0 : index
    %c0_13 = arith.constant 0 : index
    %21 = vector.load %arg5[%c0_12, %c0_13] : memref<1x128xf32, #tpu.memory_space<vmem>>, vector<1x128xf32>
    %22 = vector.broadcast %21 : vector<1x128xf32> to vector<128x128xf32>
    %23 = arith.addf %20, %22 : vector<128x128xf32>
    %c0_14 = arith.constant 0 : index
    %c0_15 = arith.constant 0 : index
    %24 = vector.load %arg6[%c0_14, %c0_15] : memref<128x128xf32, #tpu.memory_space<vmem>>, vector<128x128xf32>
    tpu.vector_store %arg6[%c0_14, %c0_15], %23 {strides = array<i32>} : memref<128x128xf32, #tpu.memory_space<vmem>>, vector<128x128xf32>,
    return
  }
  func.func @transform_0(%arg0: i32) -> (i32, i32) {
    %c0_i32 = arith.constant 0 : i32
    %c0_i32_0 = arith.constant 0 : i32
    return %arg0, %c0_i32 : i32, i32
  }
  func.func @transform_1(%arg0: i32) -> (i32, i32) {
    %c0_i32 = arith.constant 0 : i32
    %c0_i32_0 = arith.constant 0 : i32
    %c0_i32_1 = arith.constant 0 : i32
    return %c0_i32, %c0_i32_0 : i32, i32
  }
  func.func @transform_2(%arg0: i32) -> (i32, i32) {
    %c0_i32 = arith.constant 0 : i32
    %c0_i32_0 = arith.constant 0 : i32
    %c0_i32_1 = arith.constant 0 : i32
    return %c0_i32, %c0_i32_0 : i32, i32
  }
  func.func @transform_3(%arg0: i32) -> (i32, i32) {
    %c0_i32 = arith.constant 0 : i32
    %c0_i32_0 = arith.constant 0 : i32
    %c0_i32_1 = arith.constant 0 : i32
    return %c0_i32, %c0_i32_0 : i32, i32
  }
  func.func @transform_4(%arg0: i32) -> (i32, i32) {
    %c0_i32 = arith.constant 0 : i32
    %c0_i32_0 = arith.constant 0 : i32
    %c0_i32_1 = arith.constant 0 : i32
    return %c0_i32, %c0_i32_0 : i32, i32
  }
  func.func @transform_5(%arg0: i32) -> (i32, i32) {
    %c0_i32 = arith.constant 0 : i32
    %c0_i32_0 = arith.constant 0 : i32
    return %arg0, %c0_i32 : i32, i32
  }
}

</mosaic_0001>

<llo_original>
// kernel: tpu_custom_call.1
$region0: #{tpu_custom_call.1}
  #allocation0 [shape = 'u32[]', space=smem, size = 0x4, offset = 0x4, fixed_abs, tag = 'smem constant byte address 0x4 - core index']
  #allocation1 [shape = 'u32[144,128]{1,0:T(1,128)}', space=vmem, size = 0x12000, scoped, tag = 'internal scratch']
  %s0 = inlined_call_operand.hbm [shape: f32[256,128], index: 0, kind: input, shape index: {}]
  %s1 = inlined_call_operand.hbm [shape: f32[128,512], index: 1, kind: input, shape index: {}]
  %s2 = inlined_call_operand.vmem [shape: f32[1,512], index: 2, kind: input, shape index: {}]
  %s3 = inlined_call_operand.hbm [shape: f32[512,128], index: 3, kind: input, shape index: {}]
  %s4 = inlined_call_operand.vmem [shape: f32[1,128], index: 4, kind: input, shape index: {}]
  %s5 = inlined_call_operand.hbm [shape: f32[256,128], index: 5, kind: output, shape index: {}]
  %s6 = sld [smem:[#allocation0]]
  $region65: #{tpu_custom_call.1} parent=0
    _
  %s8 = ssub.s32 1, %s6
  %s9 = scalar_select 0, %s8, %s6
  $region1: #{tpu_custom_call.1} parent=0
    #allocation2 [shape = 'u8[131072]{0}', space=vmem, size = 0x20000, scoped, tag = 'input window, operand 0']
    #allocation3 [shape = 's32[2]{0}', space=sflag, size = 0x8, scoped, tag = 'scoped memory for tpu_custom_call.1']
    #allocation4 [shape = 's32[2]{0}', space=sflag, size = 0x8, scoped, tag = 'scoped memory for tpu_custom_call.1']
    #allocation5 [shape = 'u8[262144]{0}', space=vmem, size = 0x40000, scoped, tag = 'input window, operand 1, single buffered']
    #allocation6 [shape = 's32[1]{0}', space=sflag, size = 0x4, scoped, tag = 'scoped memory for tpu_custom_call.1']
    #allocation7 [shape = 'u8[262144]{0}', space=vmem, size = 0x40000, scoped, tag = 'input window, operand 3, single buffered']
    #allocation8 [shape = 'u8[131072]{0}', space=vmem, size = 0x20000, scoped, tag = 'output window, operand 0']
    %10 = vsyncpa [#allocation3], 0
    %s11 = scalar_lea.sflag [#allocation3], 1
    %12 = vsyncpa %s11, 0
    %13 = vsyncpa [#allocation6], 0
    %14 = vsyncpa [#allocation4], 0
    %s15 = scalar_lea.sflag [#allocation4], 1
    %16 = vsyncpa %s15, 0
    loop: start=0, step=1, limit=4
    $region2: #{tpu_custom_call.1} parent=1 // loop_pre_header
      _
    $region3: #{tpu_custom_call.1} parent=1 // loop_header
      %s18 = sphi 0, %s22
      %p19 = scmp.ge.s32.totalorder %s18, 4
      %s28 = sphi 0, %s30
      %s31 = sphi 0, %s28
      %s32 = sphi 0, %s31
      %s48 = sphi 0, %s32
      %s52 = sphi 0, %s52
      %s54 = sphi 0, %s52
      %s55 = sphi 0, %s54
      %s69 = sphi 0, %s55
      %s73 = sphi 0, %s73
      %s75 = sphi 0, %s73
      %s76 = sphi 0, %s75
      %s90 = sphi 0, %s76
      %s94 = sphi 0, %s94
      %s96 = sphi 0, %s94
      %s97 = sphi 0, %s96
      %s111 = sphi 0, %s97
      %s115 = sphi 0, %s115
      %s117 = sphi 0, %s115
      %s118 = sphi 0, %s117
      %s132 = sphi 0, %s118
      %s138 = sphi 0, %s140
      %s141 = sphi 0, %s138
      %s142 = sphi 0, %s141
      %s158 = sphi 0, %s142
    $region4: #{tpu_custom_call.1} parent=1 // loop_header_branch
      %21 = sbr.rel (%p19) target = $region8
    $region5: #{tpu_custom_call.1} parent=1 // loop_body
      %s23 = ssub.s32 %s18, 1
      %s24 = ssub.s32 %s18, 2
      %s25 = sadd.s32 %s18, 1
      %s26 = ssub.s32 %s18, %s25
      %p27 = scmp.eq.s32.totalorder %s26, 0
      %s29 = sadd.s32 %s28, 1
      %s30 = scalar_select %p27, %s28, %s29
      %p33 = pneg %p27
      %p34 = scmp.eq.s32.totalorder %s18, 1
      %p35 = por %p33, %p34
      %p36 = scmp.ne.s32.totalorder %s28, %s31
      %p37 = scmp.eq.s32.totalorder %s18, 0
      %p38 = por %p36, %p37
      %p39 = scmp.ne.s32.totalorder %s28, %s31
      %p40 = scmp.eq.s32.totalorder %s23, 1
      %p41 = por %p39, %p40
      %p42 = scmp.ne.s32.totalorder %s31, %s32
      %p43 = scmp.eq.s32.totalorder %s23, 0
      %p44 = por %p42, %p43
      %p45 = scmp.ne.s32.totalorder %s31, %s32
      %p46 = scmp.eq.s32.totalorder %s24, 1
      %p47 = por %p45, %p46
      %p49 = scmp.ne.s32.totalorder %s32, %s48
      %p50 = scmp.eq.s32.totalorder %s24, 0
      %p51 = por %p49, %p50
      %s53 = sadd.s32 %s52, 1
      %p56 = scmp.eq.s32.totalorder %s18, 1
      %p57 = scmp.ne.s32.totalorder %s52, %s54
      %p58 = scmp.eq.s32.totalorder %s18, 0
      %p59 = por %p57, %p58
      %p60 = scmp.ne.s32.totalorder %s52, %s54
      %p61 = scmp.eq.s32.totalorder %s23, 1
      %p62 = por %p60, %p61
      %p63 = scmp.ne.s32.totalorder %s54, %s55
      %p64 = scmp.eq.s32.totalorder %s23, 0
      %p65 = por %p63, %p64
      %p66 = scmp.ne.s32.totalorder %s54, %s55
      %p67 = scmp.eq.s32.totalorder %s24, 1
      %p68 = por %p66, %p67
      %p70 = scmp.ne.s32.totalorder %s55, %s69
      %p71 = scmp.eq.s32.totalorder %s24, 0
      %p72 = por %p70, %p71
      %s74 = sadd.s32 %s73, 1
      %p77 = scmp.eq.s32.totalorder %s18, 1
      %p78 = scmp.ne.s32.totalorder %s73, %s75
      %p79 = scmp.eq.s32.totalorder %s18, 0
      %p80 = por %p78, %p79
      %p81 = scmp.ne.s32.totalorder %s73, %s75
      %p82 = scmp.eq.s32.totalorder %s23, 1
      %p83 = por %p81, %p82
      %p84 = scmp.ne.s32.totalorder %s75, %s76
      %p85 = scmp.eq.s32.totalorder %s23, 0
      %p86 = por %p84, %p85
      %p87 = scmp.ne.s32.totalorder %s75, %s76
      %p88 = scmp.eq.s32.totalorder %s24, 1
      %p89 = por %p87, %p88
      %p91 = scmp.ne.s32.totalorder %s76, %s90
      %p92 = scmp.eq.s32.totalorder %s24, 0
      %p93 = por %p91, %p92
      %s95 = sadd.s32 %s94, 1
      %p98 = scmp.eq.s32.totalorder %s18, 1
      %p99 = scmp.ne.s32.totalorder %s94, %s96
      %p100 = scmp.eq.s32.totalorder %s18, 0
      %p101 = por %p99, %p100
      %p102 = scmp.ne.s32.totalorder %s94, %s96
      %p103 = scmp.eq.s32.totalorder %s23, 1
      %p104 = por %p102, %p103
      %p105 = scmp.ne.s32.totalorder %s96, %s97
      %p106 = scmp.eq.s32.totalorder %s23, 0
      %p107 = por %p105, %p106
      %p108 = scmp.ne.s32.totalorder %s96, %s97
      %p109 = scmp.eq.s32.totalorder %s24, 1
      %p110 = por %p108, %p109
      %p112 = scmp.ne.s32.totalorder %s97, %s111
      %p113 = scmp.eq.s32.totalorder %s24, 0
      %p114 = por %p112, %p113
      %s116 = sadd.s32 %s115, 1
      %p119 = scmp.eq.s32.totalorder %s18, 1
      %p120 = scmp.ne.s32.totalorder %s115, %s117
      %p121 = scmp.eq.s32.totalorder %s18, 0
      %p122 = por %p120, %p121
      %p123 = scmp.ne.s32.totalorder %s115, %s117
      %p124 = scmp.eq.s32.totalorder %s23, 1
      %p125 = por %p123, %p124
      %p126 = scmp.ne.s32.totalorder %s117, %s118
      %p127 = scmp.eq.s32.totalorder %s23, 0
      %p128 = por %p126, %p127
      %p129 = scmp.ne.s32.totalorder %s117, %s118
      %p130 = scmp.eq.s32.totalorder %s24, 1
      %p131 = por %p129, %p130
      %p133 = scmp.ne.s32.totalorder %s118, %s132
      %p134 = scmp.eq.s32.totalorder %s24, 0
      %p135 = por %p133, %p134
      %s136 = ssub.s32 %s18, %s25
      %p137 = scmp.eq.s32.totalorder %s136, 0
      %s139 = sadd.s32 %s138, 1
      %s140 = scalar_select %p137, %s138, %s139
      %p143 = pneg %p137
      %p144 = scmp.eq.s32.totalorder %s18, 1
      %p145 = por %p143, %p144
      %p146 = scmp.ne.s32.totalorder %s138, %s141
      %p147 = scmp.eq.s32.totalorder %s18, 0
      %p148 = por %p146, %p147
      %p149 = scmp.ne.s32.totalorder %s138, %s141
      %p150 = scmp.eq.s32.totalorder %s23, 1
      %p151 = por %p149, %p150
      %p152 = scmp.ne.s32.totalorder %s141, %s142
      %p153 = scmp.eq.s32.totalorder %s23, 0
      %p154 = por %p152, %p153
      %p155 = scmp.ne.s32.totalorder %s141, %s142
      %p156 = scmp.eq.s32.totalorder %s24, 1
      %p157 = por %p155, %p156
      %p159 = scmp.ne.s32.totalorder %s142, %s158
      %p160 = scmp.eq.s32.totalorder %s24, 0
      %p161 = por %p159, %p160
      %p162 = scmp.le.s32.totalorder 1, %s18
      %p163 = scmp.lt.s32.totalorder %s18, 3
      %p164 = pnand %p162, %p163
      %p165 = pneg %p164
      // Predicated region
      $region9: #{tpu_custom_call.1} parent=5 // pred_check
        _
      $region10: #{tpu_custom_call.1} parent=5 // pred_check_branch
        %167 = sbr.rel (%p164) target = $region12
      $region11: #{tpu_custom_call.1} parent=5 // pred_region
        %s168 = ssub.s32 %s18, 1
        // Predicated region
        $region13: #{tpu_custom_call.1} parent=11 // pred_check
          %p169 = pneg %p65
        $region14: #{tpu_custom_call.1} parent=11 // pred_check_branch
          %171 = sbr.rel (%p169) target = $region16
        $region15: #{tpu_custom_call.1} parent=11 // pred_region
          %s173 = ssub.s32 8192, 8192
          %174 = vsyncadd [#allocation6], %s173
          %s175 = sshll.u32 [#allocation5], 4
          %s176 = int_to_ptr.vmem [resolvable:$true] %s175
          %181 = dma.hbm_to_vmem [thread:$0]  %s1, 8192, %s176, [#allocation6], 512, 512, 32
        $region16: #{tpu_custom_call.1} parent=11 // pred_fallthru
          _
        // Predicated region
        $region17: #{tpu_custom_call.1} parent=11 // pred_check
          %p182 = pneg %p86
        $region18: #{tpu_custom_call.1} parent=11 // pred_check_branch
          %184 = sbr.rel (%p182) target = $region20
        $region19: #{tpu_custom_call.1} parent=11 // pred_region
          _
        $region20: #{tpu_custom_call.1} parent=11 // pred_fallthru
          _
        // Predicated region
        $region21: #{tpu_custom_call.1} parent=11 // pred_check
          %p185 = pneg %p107
        $region22: #{tpu_custom_call.1} parent=11 // pred_check_branch
          %187 = sbr.rel (%p185) target = $region24
        $region23: #{tpu_custom_call.1} parent=11 // pred_region
          %s189 = ssub.s32 8192, 8192
          %190 = vsyncadd [#allocation6], %s189
          %s191 = sshll.u32 [#allocation7], 4
          %s192 = int_to_ptr.vmem [resolvable:$true] %s191
          %197 = dma.hbm_to_vmem [thread:$0]  %s3, 8192, %s192, [#allocation6], 128, 128, 8
        $region24: #{tpu_custom_call.1} parent=11 // pred_fallthru
          _
        // Predicated region
        $region25: #{tpu_custom_call.1} parent=11 // pred_check
          %p198 = pneg %p128
        $region26: #{tpu_custom_call.1} parent=11 // pred_check_branch
          %200 = sbr.rel (%p198) target = $region28
        $region27: #{tpu_custom_call.1} parent=11 // pred_region
          _
        $region28: #{tpu_custom_call.1} parent=11 // pred_fallthru
          _
      $region12: #{tpu_custom_call.1} parent=5 // pred_fallthru
        _
      %p201 = scmp.lt.s32.totalorder %s18, 2
      // Predicated region
      $region29: #{tpu_custom_call.1} parent=5 // pred_check
        %p202 = pneg %p201
      $region30: #{tpu_custom_call.1} parent=5 // pred_check_branch
        %204 = sbr.rel (%p202) target = $region32
      $region31: #{tpu_custom_call.1} parent=5 // pred_region
        // Predicated region
        $region33: #{tpu_custom_call.1} parent=31 // pred_check
          %p205 = pneg %p38
        $region34: #{tpu_custom_call.1} parent=31 // pred_check_branch
          %207 = sbr.rel (%p205) target = $region36
        $region35: #{tpu_custom_call.1} parent=31 // pred_region
          %s208 = sand.u32 %s28, 1
          %s209 = scalar_lea.sflag [#allocation3], %s208
          %s210 = sand.u32 %s28, 1
          %s211 = smul.addr %s210, 128
          %s212 = scalar_lea.vmem [#allocation2], %s211
          %s213 = smul.u32 16, %s18
          %s215 = ssub.s32 2048, 2048
          %216 = vsyncadd %s209, %s215
          %s217 = smul.addr %s213, 128
          %s218 = scalar_lea.hbm %s0, %s217
          %s219 = sshll.u32 %s212, 4
          %s220 = int_to_ptr.vmem [resolvable:$true] %s219
          %225 = dma.hbm_to_vmem [thread:$0]  %s218, 2048, %s220, %s209, 128, 128, 8
        $region36: #{tpu_custom_call.1} parent=31 // pred_fallthru
          _
      $region32: #{tpu_custom_call.1} parent=5 // pred_fallthru
        _
      %p226 = scmp.le.s32.totalorder 1, %s18
      %p227 = scmp.lt.s32.totalorder %s18, 3
      %p228 = pnand %p226, %p227
      %p229 = pneg %p228
      // Predicated region
      $region37: #{tpu_custom_call.1} parent=5 // pred_check
        _
      $region38: #{tpu_custom_call.1} parent=5 // pred_check_branch
        %231 = sbr.rel (%p228) target = $region40
      $region39: #{tpu_custom_call.1} parent=5 // pred_region
        %s232 = ssub.s32 %s18, 1
        %s233 = sand.u32 %s31, 1
        %s234 = scalar_lea.sflag [#allocation3], %s233
        %s235 = sand.u32 %s31, 1
        %s236 = smul.addr %s235, 128
        %s237 = scalar_lea.vmem [#allocation2], %s236
        // Predicated region
        $region41: #{tpu_custom_call.1} parent=39 // pred_check
          %p238 = pneg %p44
        $region42: #{tpu_custom_call.1} parent=39 // pred_check_branch
          %240 = sbr.rel (%p238) target = $region44
        $region43: #{tpu_custom_call.1} parent=39 // pred_region
          %241 = dma.done %s234, 2048
        $region44: #{tpu_custom_call.1} parent=39 // pred_fallthru
          _
        // Predicated region
        $region45: #{tpu_custom_call.1} parent=39 // pred_check
          %p242 = pneg %p65
        $region46: #{tpu_custom_call.1} parent=39 // pred_check_branch
          %244 = sbr.rel (%p242) target = $region48
        $region47: #{tpu_custom_call.1} parent=39 // pred_region
          %245 = dma.done [#allocation6], 8192
        $region48: #{tpu_custom_call.1} parent=39 // pred_fallthru
          _
        // Predicated region
        $region49: #{tpu_custom_call.1} parent=39 // pred_check
          %p246 = pneg %p107
        $region50: #{tpu_custom_call.1} parent=39 // pred_check_branch
          %248 = sbr.rel (%p246) target = $region52
        $region51: #{tpu_custom_call.1} parent=39 // pred_region
          %249 = dma.done [#allocation6], 8192
        $region52: #{tpu_custom_call.1} parent=39 // pred_fallthru
          _
        %s250 = sand.u32 %s31, 1
        %s251 = scalar_lea.sflag [#allocation3], %s250
        %s252 = sand.u32 %s31, 1
        %s253 = smul.addr %s252, 128
        %s254 = scalar_lea.vmem [#allocation2], %s253
        %p255 = pneg %p44
        %p256 = pneg %p41
        %p257 = pneg %p65
        %p258 = pneg %p62
        %p259 = pneg %p86
        %p260 = pneg %p83
        %p261 = pneg %p107
        %p262 = pneg %p104
        %p263 = pneg %p128
        %p264 = pneg %p125
        %p265 = pneg %p154
        %p266 = pneg %p151
        %s267 = sand.u32 %s141, 1
        %s268 = scalar_lea.sflag [#allocation4], %s267
        %s269 = sand.u32 %s141, 1
        %s270 = smul.addr %s269, 128
        %s271 = scalar_lea.vmem [#allocation8], %s270
        %s272 = smul.u32 16, %s23
        %s273 = smul.u32 16, %s23
        %v274 = vld [vmem:[%s237] sm:$0xff]
        %v275 = vld [vmem:[%s237 + $0x8] sm:$0xff]
        %v276 = vld [vmem:[%s237 + $0x10] sm:$0xff]
        %v277 = vld [vmem:[%s237 + $0x18] sm:$0xff]
        %v278 = vld [vmem:[%s237 + $0x20] sm:$0xff]
        %v279 = vld [vmem:[%s237 + $0x28] sm:$0xff]
        %v280 = vld [vmem:[%s237 + $0x30] sm:$0xff]
        %v281 = vld [vmem:[%s237 + $0x38] sm:$0xff]
        %v282 = vld [vmem:[%s237 + $0x40] sm:$0xff]
        %v283 = vld [vmem:[%s237 + $0x48] sm:$0xff]
        %v284 = vld [vmem:[%s237 + $0x50] sm:$0xff]
        %v285 = vld [vmem:[%s237 + $0x58] sm:$0xff]
        %v286 = vld [vmem:[%s237 + $0x60] sm:$0xff]
        %v287 = vld [vmem:[%s237 + $0x68] sm:$0xff]
        %v288 = vld [vmem:[%s237 + $0x70] sm:$0xff]
        %v289 = vld [vmem:[%s237 + $0x78] sm:$0xff]
        %v290 = vld [vmem:[#allocation5] sm:$0xff]
        %v291 = vld [vmem:[#allocation5 + $0x8] sm:$0xff]
        %v292 = vld [vmem:[#allocation5 + $0x10] sm:$0xff]
        %v293 = vld [vmem:[#allocation5 + $0x18] sm:$0xff]
        %v294 = vld [vmem:[#allocation5 + $0x20] sm:$0xff]
        %v295 = vld [vmem:[#allocation5 + $0x28] sm:$0xff]
        %v296 = vld [vmem:[#allocation5 + $0x30] sm:$0xff]
        %v297 = vld [vmem:[#allocation5 + $0x38] sm:$0xff]
        %v298 = vld [vmem:[#allocation5 + $0x40] sm:$0xff]
        %v299 = vld [vmem:[#allocation5 + $0x48] sm:$0xff]
        %v300 = vld [vmem:[#allocation5 + $0x50] sm:$0xff]
        %v301 = vld [vmem:[#allocation5 + $0x58] sm:$0xff]
        %v302 = vld [vmem:[#allocation5 + $0x60] sm:$0xff]
        %v303 = vld [vmem:[#allocation5 + $0x68] sm:$0xff]
        %v304 = vld [vmem:[#allocation5 + $0x70] sm:$0xff]
        %v305 = vld [vmem:[#allocation5 + $0x78] sm:$0xff]
        %v306 = vld [vmem:[#allocation5 + $0x80] sm:$0xff]
        %v307 = vld [vmem:[#allocation5 + $0x88] sm:$0xff]
        %v308 = vld [vmem:[#allocation5 + $0x90] sm:$0xff]
        %v309 = vld [vmem:[#allocation5 + $0x98] sm:$0xff]
        %v310 = vld [vmem:[#allocation5 + $0xa0] sm:$0xff]
        %v311 = vld [vmem:[#allocation5 + $0xa8] sm:$0xff]
        %v312 = vld [vmem:[#allocation5 + $0xb0] sm:$0xff]
        %v313 = vld [vmem:[#allocation5 + $0xb8] sm:$0xff]
        %v314 = vld [vmem:[#allocation5 + $0xc0] sm:$0xff]
        %v315 = vld [vmem:[#allocation5 + $0xc8] sm:$0xff]
        %v316 = vld [vmem:[#allocation5 + $0xd0] sm:$0xff]
        %v317 = vld [vmem:[#allocation5 + $0xd8] sm:$0xff]
        %v318 = vld [vmem:[#allocation5 + $0xe0] sm:$0xff]
        %v319 = vld [vmem:[#allocation5 + $0xe8] sm:$0xff]
        %v320 = vld [vmem:[#allocation5 + $0xf0] sm:$0xff]
        %v321 = vld [vmem:[#allocation5 + $0xf8] sm:$0xff]
        %v322 = vld [vmem:[#allocation5 + $0x100] sm:$0xff]
        %v323 = vld [vmem:[#allocation5 + $0x108] sm:$0xff]
        %v324 = vld [vmem:[#allocation5 + $0x110] sm:$0xff]
        %v325 = vld [vmem:[#allocation5 + $0x118] sm:$0xff]
        %v326 = vld [vmem:[#allocation5 + $0x120] sm:$0xff]
        %v327 = vld [vmem:[#allocation5 + $0x128] sm:$0xff]
        %v328 = vld [vmem:[#allocation5 + $0x130] sm:$0xff]
        %v329 = vld [vmem:[#allocation5 + $0x138] sm:$0xff]
        %v330 = vld [vmem:[#allocation5 + $0x140] sm:$0xff]
        %v331 = vld [vmem:[#allocation5 + $0x148] sm:$0xff]
        %v332 = vld [vmem:[#allocation5 + $0x150] sm:$0xff]
        %v333 = vld [vmem:[#allocation5 + $0x158] sm:$0xff]
        %v334 = vld [vmem:[#allocation5 + $0x160] sm:$0xff]
        %v335 = vld [vmem:[#allocation5 + $0x168] sm:$0xff]
        %v336 = vld [vmem:[#allocation5 + $0x170] sm:$0xff]
        %v337 = vld [vmem:[#allocation5 + $0x178] sm:$0xff]
        %v338 = vld [vmem:[#allocation5 + $0x180] sm:$0xff]
        %v339 = vld [vmem:[#allocation5 + $0x188] sm:$0xff]
        %v340 = vld [vmem:[#allocation5 + $0x190] sm:$0xff]
        %v341 = vld [vmem:[#allocation5 + $0x198] sm:$0xff]
        %v342 = vld [vmem:[#allocation5 + $0x1a0] sm:$0xff]
        %v343 = vld [vmem:[#allocation5 + $0x1a8] sm:$0xff]
        %v344 = vld [vmem:[#allocation5 + $0x1b0] sm:$0xff]
        %v345 = vld [vmem:[#allocation5 + $0x1b8] sm:$0xff]
        %v346 = vld [vmem:[#allocation5 + $0x1c0] sm:$0xff]
        %v347 = vld [vmem:[#allocation5 + $0x1c8] sm:$0xff]
        %v348 = vld [vmem:[#allocation5 + $0x1d0] sm:$0xff]
        %v349 = vld [vmem:[#allocation5 + $0x1d8] sm:$0xff]
        %v350 = vld [vmem:[#allocation5 + $0x1e0] sm:$0xff]
        %v351 = vld [vmem:[#allocation5 + $0x1e8] sm:$0xff]
        %v352 = vld [vmem:[#allocation5 + $0x1f0] sm:$0xff]
        %v353 = vld [vmem:[#allocation5 + $0x1f8] sm:$0xff]
        %v354 = vld [vmem:[%s2] sm:$0xf]
        %v356 = vlaneseq
        %v357 = vshrl.u32 %v356, 7
        %v358 = vsub.s32 0, %v357
        %v359 = vrot.slane %v354, %v358
        %v360 = vlaneseq
        %v361 = vshrl.u32 %v360, 7
        %v362 = vsub.s32 1, %v361
        %v363 = vrot.slane %v354, %v362
        %v364 = vlaneseq
        %v365 = vshrl.u32 %v364, 7
        %v366 = vsub.s32 2, %v365
        %v367 = vrot.slane %v354, %v366
        %v368 = vlaneseq
        %v369 = vshrl.u32 %v368, 7
        %v370 = vsub.s32 3, %v369
        %v371 = vrot.slane %v354, %v370
        %376 = vmatprep.subr.mxu0 %v291
        %377 = vmatpush1.msra.mxu0 %v290
        %378 = vmatprep.subr.mxu0 %v295
        %379 = vmatpush1.msra.mxu0 %v294
        %380 = vmatprep.subr.mxu0 %v299
        %381 = vmatpush1.msra.mxu0 %v298
        %382 = vmatprep.subr.mxu0 %v303
        %383 = vmatpush1.msra.mxu0 %v302
        %384 = vmatprep.subr.mxu0 %v307
        %385 = vmatpush1.msra.mxu0 %v306
        %386 = vmatprep.subr.mxu0 %v311
        %387 = vmatpush1.msra.mxu0 %v310
        %388 = vmatprep.subr.mxu0 %v315
        %389 = vmatpush1.msra.mxu0 %v314
        %390 = vmatprep.subr.mxu0 %v319
        %391 = vmatpush1.msra.mxu0 %v318
        %392 = vmatprep.subr.mxu0 %v323
        %393 = vmatpush1.msra.mxu0 %v322
        %394 = vmatprep.subr.mxu0 %v327
        %395 = vmatpush1.msra.mxu0 %v326
        %396 = vmatprep.subr.mxu0 %v331
        %397 = vmatpush1.msra.mxu0 %v330
        %398 = vmatprep.subr.mxu0 %v335
        %399 = vmatpush1.msra.mxu0 %v334
        %400 = vmatprep.subr.mxu0 %v339
        %401 = vmatpush1.msra.mxu0 %v338
        %402 = vmatprep.subr.mxu0 %v343
        %403 = vmatpush1.msra.mxu0 %v342
        %404 = vmatprep.subr.mxu0 %v347
        %405 = vmatpush1.msra.mxu0 %v346
        %406 = vmatprep.subr.mxu0 %v351
        %407 = vmatpush1.msra.mxu0 %v350
        %408 = vmatprep.subr.mxu0 0.0
        %409 = vmatpush1.msra.mxu0 0.0
        %410 = vmatprep.subr.mxu0 0.0
        %411 = vmatpush1.msra.mxu0 0.0
        %412 = vmatprep.subr.mxu0 0.0
        %413 = vmatpush1.msra.mxu0 0.0
        %414 = vmatprep.subr.mxu0 0.0
        %415 = vmatpush1.msra.mxu0 0.0
        %416 = vmatprep.subr.mxu0 0.0
        %417 = vmatpush1.msra.mxu0 0.0
        %418 = vmatprep.subr.mxu0 0.0
        %419 = vmatpush1.msra.mxu0 0.0
        %420 = vmatprep.subr.mxu0 0.0
        %421 = vmatpush1.msra.mxu0 0.0
        %422 = vmatprep.subr.mxu0 0.0
        %423 = vmatpush1.msra.mxu0 0.0
        %424 = vmatprep.subr.mxu0 0.0
        %425 = vmatpush1.msra.mxu0 0.0
        %426 = vmatprep.subr.mxu0 0.0
        %427 = vmatpush1.msra.mxu0 0.0
        %428 = vmatprep.subr.mxu0 0.0
        %429 = vmatpush1.msra.mxu0 0.0
        %430 = vmatprep.subr.mxu0 0.0
        %431 = vmatpush1.msra.mxu0 0.0
        %432 = vmatprep.subr.mxu0 0.0
        %433 = vmatpush1.msra.mxu0 0.0
        %434 = vmatprep.subr.mxu0 0.0
        %435 = vmatpush1.msra.mxu0 0.0
        %436 = vmatprep.subr.mxu0 0.0
        %437 = vmatpush1.msra.mxu0 0.0
        %438 = vmatprep.subr.mxu0 0.0
        %439 = vmatpush1.msra.mxu0 0.0
        %440 = vmatprep.mubr.f32.mxu0 0.0
        %441 = vmatmul.mubr.f32.gmra.mrb[0].mxu0 %v274
        %v442 = vpop.f32.mrb[0].mxu0
        %v443 = vadd.f32 %v359, %v442
        %v444 = vpop.f32.mrb[0].mxu0
        %v445 = vadd.f32 %v363, %v444
        %446 = vmatprep.mubr.f32.mxu0 0.0
        %447 = vmatmul.mubr.f32.gmra.mrb[0].mxu0 %v275
        %v448 = vpop.f32.mrb[0].mxu0
        %v449 = vadd.f32 %v359, %v448
        %v450 = vpop.f32.mrb[0].mxu0
        %v451 = vadd.f32 %v363, %v450
        %452 = vmatprep.mubr.f32.mxu0 0.0
        %453 = vmatmul.mubr.f32.gmra.mrb[0].mxu0 %v276
        %v454 = vpop.f32.mrb[0].mxu0
        %v455 = vadd.f32 %v359, %v454
        %v456 = vpop.f32.mrb[0].mxu0
        %v457 = vadd.f32 %v363, %v456
        %458 = vmatprep.mubr.f32.mxu0 0.0
        %459 = vmatmul.mubr.f32.gmra.mrb[0].mxu0 %v277
        %v460 = vpop.f32.mrb[0].mxu0
        %v461 = vadd.f32 %v359, %v460
        %v462 = vpop.f32.mrb[0].mxu0
        %v463 = vadd.f32 %v363, %v462
        %464 = vmatprep.mubr.f32.mxu0 0.0
        %465 = vmatmul.mubr.f32.gmra.mrb[0].mxu0 %v278
        %v466 = vpop.f32.mrb[0].mxu0
        %v467 = vadd.f32 %v359, %v466
        %v468 = vpop.f32.mrb[0].mxu0
        %v469 = vadd.f32 %v363, %v468
        %470 = vmatprep.mubr.f32.mxu0 0.0
        %471 = vmatmul.mubr.f32.gmra.mrb[0].mxu0 %v279
        %v472 = vpop.f32.mrb[0].mxu0
        %v473 = vadd.f32 %v359, %v472
        %v474 = vpop.f32.mrb[0].mxu0
        %v475 = vadd.f32 %v363, %v474
        %476 = vmatprep.mubr.f32.mxu0 0.0
        %477 = vmatmul.mubr.f32.gmra.mrb[0].mxu0 %v280
        %v478 = vpop.f32.mrb[0].mxu0
        %v479 = vadd.f32 %v359, %v478
        %v480 = vpop.f32.mrb[0].mxu0
        %v481 = vadd.f32 %v363, %v480
        %482 = vmatprep.mubr.f32.mxu0 0.0
        %483 = vmatmul.mubr.f32.gmra.mrb[0].mxu0 %v281
        %v484 = vpop.f32.mrb[0].mxu0
        %v485 = vadd.f32 %v359, %v484
        %v486 = vpop.f32.mrb[0].mxu0
        %v487 = vadd.f32 %v363, %v486
        %488 = vmatprep.mubr.f32.mxu0 0.0
        %489 = vmatmul.mubr.f32.gmra.mrb[0].mxu0 %v282
        %v490 = vpop.f32.mrb[0].mxu0
        %v491 = vadd.f32 %v359, %v490
        %v492 = vpop.f32.mrb[0].mxu0
        %v493 = vadd.f32 %v363, %v492
        %494 = vmatprep.mubr.f32.mxu0 0.0
        %495 = vmatmul.mubr.f32.gmra.mrb[0].mxu0 %v283
        %v496 = vpop.f32.mrb[0].mxu0
        %v497 = vadd.f32 %v359, %v496
        %v498 = vpop.f32.mrb[0].mxu0
        %v499 = vadd.f32 %v363, %v498
        %500 = vmatprep.mubr.f32.mxu0 0.0
        %501 = vmatmul.mubr.f32.gmra.mrb[0].mxu0 %v284
        %v502 = vpop.f32.mrb[0].mxu0
        %v503 = vadd.f32 %v359, %v502
        %v504 = vpop.f32.mrb[0].mxu0
        %v505 = vadd.f32 %v363, %v504
        %506 = vmatprep.mubr.f32.mxu0 0.0
        %507 = vmatmul.mubr.f32.gmra.mrb[0].mxu0 %v285
        %v508 = vpop.f32.mrb[0].mxu0
        %v509 = vadd.f32 %v359, %v508
        %v510 = vpop.f32.mrb[0].mxu0
        %v511 = vadd.f32 %v363, %v510
        %512 = vmatprep.mubr.f32.mxu0 0.0
        %513 = vmatmul.mubr.f32.gmra.mrb[0].mxu0 %v286
        %v514 = vpop.f32.mrb[0].mxu0
        %v515 = vadd.f32 %v359, %v514
        %v516 = vpop.f32.mrb[0].mxu0
        %v517 = vadd.f32 %v363, %v516
        %518 = vmatprep.mubr.f32.mxu0 0.0
        %519 = vmatmul.mubr.f32.gmra.mrb[0].mxu0 %v287
        %v520 = vpop.f32.mrb[0].mxu0
        %v521 = vadd.f32 %v359, %v520
        %v522 = vpop.f32.mrb[0].mxu0
        %v523 = vadd.f32 %v363, %v522
        %524 = vmatprep.mubr.f32.mxu0 0.0
        %525 = vmatmul.mubr.f32.gmra.mrb[0].mxu0 %v288
        %v526 = vpop.f32.mrb[0].mxu0
        %v527 = vadd.f32 %v359, %v526
        %v528 = vpop.f32.mrb[0].mxu0
        %v529 = vadd.f32 %v363, %v528
        %530 = vmatprep.mubr.f32.mxu0 0.0
        %531 = vmatmul.mubr.f32.gmra.mrb[0].mxu0 %v289
        %v532 = vpop.f32.mrb[0].mxu0
        %v533 = vadd.f32 %v359, %v532
        %v534 = vpop.f32.mrb[0].mxu0
        %v535 = vadd.f32 %v363, %v534
        %536 = vdwg.mxu0
        %537 = vmatprep.subr.mxu0 %v293
        %538 = vmatpush1.msra.mxu0 %v292
        %539 = vmatprep.subr.mxu0 %v297
        %540 = vmatpush1.msra.mxu0 %v296
        %541 = vmatprep.subr.mxu0 %v301
        %542 = vmatpush1.msra.mxu0 %v300
        %543 = vmatprep.subr.mxu0 %v305
        %544 = vmatpush1.msra.mxu0 %v304
        %545 = vmatprep.subr.mxu0 %v309
        %546 = vmatpush1.msra.mxu0 %v308
        %547 = vmatprep.subr.mxu0 %v313
        %548 = vmatpush1.msra.mxu0 %v312
        %549 = vmatprep.subr.mxu0 %v317
        %550 = vmatpush1.msra.mxu0 %v316
        %551 = vmatprep.subr.mxu0 %v321
        %552 = vmatpush1.msra.mxu0 %v320
        %553 = vmatprep.subr.mxu0 %v325
        %554 = vmatpush1.msra.mxu0 %v324
        %555 = vmatprep.subr.mxu0 %v329
        %556 = vmatpush1.msra.mxu0 %v328
        %557 = vmatprep.subr.mxu0 %v333
        %558 = vmatpush1.msra.mxu0 %v332
        %559 = vmatprep.subr.mxu0 %v337
        %560 = vmatpush1.msra.mxu0 %v336
        %561 = vmatprep.subr.mxu0 %v341
        %562 = vmatpush1.msra.mxu0 %v340
        %563 = vmatprep.subr.mxu0 %v345
        %564 = vmatpush1.msra.mxu0 %v344
        %565 = vmatprep.subr.mxu0 %v349
        %566 = vmatpush1.msra.mxu0 %v348
        %567 = vmatprep.subr.mxu0 %v353
        %568 = vmatpush1.msra.mxu0 %v352
        %569 = vmatprep.subr.mxu0 0.0
        %570 = vmatpush1.msra.mxu0 0.0
        %571 = vmatprep.subr.mxu0 0.0
        %572 = vmatpush1.msra.mxu0 0.0
        %573 = vmatprep.subr.mxu0 0.0
        %574 = vmatpush1.msra.mxu0 0.0
        %575 = vmatprep.subr.mxu0 0.0
        %576 = vmatpush1.msra.mxu0 0.0
        %577 = vmatprep.subr.mxu0 0.0
        %578 = vmatpush1.msra.mxu0 0.0
        %579 = vmatprep.subr.mxu0 0.0
        %580 = vmatpush1.msra.mxu0 0.0
        %581 = vmatprep.subr.mxu0 0.0
        %582 = vmatpush1.msra.mxu0 0.0
        %583 = vmatprep.subr.mxu0 0.0
        %584 = vmatpush1.msra.mxu0 0.0
        %585 = vmatprep.subr.mxu0 0.0
        %586 = vmatpush1.msra.mxu0 0.0
        %587 = vmatprep.subr.mxu0 0.0
        %588 = vmatpush1.msra.mxu0 0.0
        %589 = vmatprep.subr.mxu0 0.0
        %590 = vmatpush1.msra.mxu0 0.0
        %591 = vmatprep.subr.mxu0 0.0
        %592 = vmatpush1.msra.mxu0 0.0
        %593 = vmatprep.subr.mxu0 0.0
        %594 = vmatpush1.msra.mxu0 0.0
        %595 = vmatprep.subr.mxu0 0.0
        %596 = vmatpush1.msra.mxu0 0.0
        %597 = vmatprep.subr.mxu0 0.0
        %598 = vmatpush1.msra.mxu0 0.0
        %599 = vmatprep.subr.mxu0 0.0
        %600 = vmatpush1.msra.mxu0 0.0
        %601 = vmatprep.mubr.f32.mxu0 0.0
        %602 = vmatmul.mubr.f32.gmra.mrb[0].mxu0 %v274
        %v603 = vpop.f32.mrb[0].mxu0
        %v604 = vadd.f32 %v367, %v603
        %v605 = vpop.f32.mrb[0].mxu0
        %v606 = vadd.f32 %v371, %v605
        %607 = vmatprep.mubr.f32.mxu0 0.0
        %608 = vmatmul.mubr.f32.gmra.mrb[0].mxu0 %v275
        %v609 = vpop.f32.mrb[0].mxu0
        %v610 = vadd.f32 %v367, %v609
        %v611 = vpop.f32.mrb[0].mxu0
        %v612 = vadd.f32 %v371, %v611
        %613 = vmatprep.mubr.f32.mxu0 0.0
        %614 = vmatmul.mubr.f32.gmra.mrb[0].mxu0 %v276
        %v615 = vpop.f32.mrb[0].mxu0
        %v616 = vadd.f32 %v367, %v615
        %v617 = vpop.f32.mrb[0].mxu0
        %v618 = vadd.f32 %v371, %v617
        %619 = vmatprep.mubr.f32.mxu0 0.0
        %620 = vmatmul.mubr.f32.gmra.mrb[0].mxu0 %v277
        %v621 = vpop.f32.mrb[0].mxu0
        %v622 = vadd.f32 %v367, %v621
        %v623 = vpop.f32.mrb[0].mxu0
        %v624 = vadd.f32 %v371, %v623
        %625 = vmatprep.mubr.f32.mxu0 0.0
        %626 = vmatmul.mubr.f32.gmra.mrb[0].mxu0 %v278
        %v627 = vpop.f32.mrb[0].mxu0
        %v628 = vadd.f32 %v367, %v627
        %v629 = vpop.f32.mrb[0].mxu0
        %v630 = vadd.f32 %v371, %v629
        %631 = vmatprep.mubr.f32.mxu0 0.0
        %632 = vmatmul.mubr.f32.gmra.mrb[0].mxu0 %v279
        %v633 = vpop.f32.mrb[0].mxu0
        %v634 = vadd.f32 %v367, %v633
        %v635 = vpop.f32.mrb[0].mxu0
        %v636 = vadd.f32 %v371, %v635
        %637 = vmatprep.mubr.f32.mxu0 0.0
        %638 = vmatmul.mubr.f32.gmra.mrb[0].mxu0 %v280
        %v639 = vpop.f32.mrb[0].mxu0
        %v640 = vadd.f32 %v367, %v639
        %v641 = vpop.f32.mrb[0].mxu0
        %v642 = vadd.f32 %v371, %v641
        %643 = vmatprep.mubr.f32.mxu0 0.0
        %644 = vmatmul.mubr.f32.gmra.mrb[0].mxu0 %v281
        %v645 = vpop.f32.mrb[0].mxu0
        %v646 = vadd.f32 %v367, %v645
        %v647 = vpop.f32.mrb[0].mxu0
        %v648 = vadd.f32 %v371, %v647
        %649 = vmatprep.mubr.f32.mxu0 0.0
        %650 = vmatmul.mubr.f32.gmra.mrb[0].mxu0 %v282
        %v651 = vpop.f32.mrb[0].mxu0
        %v652 = vadd.f32 %v367, %v651
        %v653 = vpop.f32.mrb[0].mxu0
        %v654 = vadd.f32 %v371, %v653
        %655 = vmatprep.mubr.f32.mxu0 0.0
        %656 = vmatmul.mubr.f32.gmra.mrb[0].mxu0 %v283
        %v657 = vpop.f32.mrb[0].mxu0
        %v658 = vadd.f32 %v367, %v657
        %v659 = vpop.f32.mrb[0].mxu0
        %v660 = vadd.f32 %v371, %v659
        %661 = vmatprep.mubr.f32.mxu0 0.0
        %662 = vmatmul.mubr.f32.gmra.mrb[0].mxu0 %v284
        %v663 = vpop.f32.mrb[0].mxu0
        %v664 = vadd.f32 %v367, %v663
        %v665 = vpop.f32.mrb[0].mxu0
        %v666 = vadd.f32 %v371, %v665
        %667 = vmatprep.mubr.f32.mxu0 0.0
        %668 = vmatmul.mubr.f32.gmra.mrb[0].mxu0 %v285
        %v669 = vpop.f32.mrb[0].mxu0
        %v670 = vadd.f32 %v367, %v669
        %v671 = vpop.f32.mrb[0].mxu0
        %v672 = vadd.f32 %v371, %v671
        %673 = vmatprep.mubr.f32.mxu0 0.0
        %674 = vmatmul.mubr.f32.gmra.mrb[0].mxu0 %v286
        %v675 = vpop.f32.mrb[0].mxu0
        %v676 = vadd.f32 %v367, %v675
        %v677 = vpop.f32.mrb[0].mxu0
        %v678 = vadd.f32 %v371, %v677
        %679 = vmatprep.mubr.f32.mxu0 0.0
        %680 = vmatmul.mubr.f32.gmra.mrb[0].mxu0 %v287
        %v681 = vpop.f32.mrb[0].mxu0
        %v682 = vadd.f32 %v367, %v681
        %v683 = vpop.f32.mrb[0].mxu0
        %v684 = vadd.f32 %v371, %v683
        %685 = vmatprep.mubr.f32.mxu0 0.0
        %686 = vmatmul.mubr.f32.gmra.mrb[0].mxu0 %v288
        %v687 = vpop.f32.mrb[0].mxu0
        %v688 = vadd.f32 %v367, %v687
        %v689 = vpop.f32.mrb[0].mxu0
        %v690 = vadd.f32 %v371, %v689
        %691 = vmatprep.mubr.f32.mxu0 0.0
        %692 = vmatmul.mubr.f32.gmra.mrb[0].mxu0 %v289
        %v693 = vpop.f32.mrb[0].mxu0
        %v694 = vadd.f32 %v367, %v693
        %v695 = vpop.f32.mrb[0].mxu0
        %v696 = vadd.f32 %v371, %v695
        %697 = vdwg.mxu0
        %v698 = vmul.f32 %v443, 0.5
        %v699 = vmul.f32 %v445, 0.5
        %v700 = vmul.f32 %v604, 0.5
        %v701 = vmul.f32 %v606, 0.5
        %v702 = vmul.f32 %v449, 0.5
        %v703 = vmul.f32 %v451, 0.5
        %v704 = vmul.f32 %v610, 0.5
        %v705 = vmul.f32 %v612, 0.5
        %v706 = vmul.f32 %v455, 0.5
        %v707 = vmul.f32 %v457, 0.5
        %v708 = vmul.f32 %v616, 0.5
        %v709 = vmul.f32 %v618, 0.5
        %v710 = vmul.f32 %v461, 0.5
        %v711 = vmul.f32 %v463, 0.5
        %v712 = vmul.f32 %v622, 0.5
        %v713 = vmul.f32 %v624, 0.5
        %v714 = vmul.f32 %v467, 0.5
        %v715 = vmul.f32 %v469, 0.5
        %v716 = vmul.f32 %v628, 0.5
        %v717 = vmul.f32 %v630, 0.5
        %v718 = vmul.f32 %v473, 0.5
        %v719 = vmul.f32 %v475, 0.5
        %v720 = vmul.f32 %v634, 0.5
        %v721 = vmul.f32 %v636, 0.5
        %v722 = vmul.f32 %v479, 0.5
        %v723 = vmul.f32 %v481, 0.5
        %v724 = vmul.f32 %v640, 0.5
        %v725 = vmul.f32 %v642, 0.5
        %v726 = vmul.f32 %v485, 0.5
        %v727 = vmul.f32 %v487, 0.5
        %v728 = vmul.f32 %v646, 0.5
        %v729 = vmul.f32 %v648, 0.5
        %v730 = vmul.f32 %v491, 0.5
        %v731 = vmul.f32 %v493, 0.5
        %v732 = vmul.f32 %v652, 0.5
        %v733 = vmul.f32 %v654, 0.5
        %v734 = vmul.f32 %v497, 0.5
        %v735 = vmul.f32 %v499, 0.5
        %v736 = vmul.f32 %v658, 0.5
        %v737 = vmul.f32 %v660, 0.5
        %v738 = vmul.f32 %v503, 0.5
        %v739 = vmul.f32 %v505, 0.5
        %v740 = vmul.f32 %v664, 0.5
        %v741 = vmul.f32 %v666, 0.5
        %v742 = vmul.f32 %v509, 0.5
        %v743 = vmul.f32 %v511, 0.5
        %v744 = vmul.f32 %v670, 0.5
        %v745 = vmul.f32 %v672, 0.5
        %v746 = vmul.f32 %v515, 0.5
        %v747 = vmul.f32 %v517, 0.5
        %v748 = vmul.f32 %v676, 0.5
        %v749 = vmul.f32 %v678, 0.5
        %v750 = vmul.f32 %v521, 0.5
        %v751 = vmul.f32 %v523, 0.5
        %v752 = vmul.f32 %v682, 0.5
        %v753 = vmul.f32 %v684, 0.5
        %v754 = vmul.f32 %v527, 0.5
        %v755 = vmul.f32 %v529, 0.5
        %v756 = vmul.f32 %v688, 0.5
        %v757 = vmul.f32 %v690, 0.5
        %v758 = vmul.f32 %v533, 0.5
        %v759 = vmul.f32 %v535, 0.5
        %v760 = vmul.f32 %v694, 0.5
        %v761 = vmul.f32 %v696, 0.5
        %v762 = vmul.f32 %v443, 0.044715
        %v763 = vmul.f32 %v445, 0.044715
        %v764 = vmul.f32 %v604, 0.044715
        %v765 = vmul.f32 %v606, 0.044715
        %v766 = vmul.f32 %v449, 0.044715
        %v767 = vmul.f32 %v451, 0.044715
        %v768 = vmul.f32 %v610, 0.044715
        %v769 = vmul.f32 %v612, 0.044715
        %v770 = vmul.f32 %v455, 0.044715
        %v771 = vmul.f32 %v457, 0.044715
        %v772 = vmul.f32 %v616, 0.044715
        %v773 = vmul.f32 %v618, 0.044715
        %v774 = vmul.f32 %v461, 0.044715
        %v775 = vmul.f32 %v463, 0.044715
        %v776 = vmul.f32 %v622, 0.044715
        %v777 = vmul.f32 %v624, 0.044715
        %v778 = vmul.f32 %v467, 0.044715
        %v779 = vmul.f32 %v469, 0.044715
        %v780 = vmul.f32 %v628, 0.044715
        %v781 = vmul.f32 %v630, 0.044715
        %v782 = vmul.f32 %v473, 0.044715
        %v783 = vmul.f32 %v475, 0.044715
        %v784 = vmul.f32 %v634, 0.044715
        %v785 = vmul.f32 %v636, 0.044715
        %v786 = vmul.f32 %v479, 0.044715
        %v787 = vmul.f32 %v481, 0.044715
        %v788 = vmul.f32 %v640, 0.044715
        %v789 = vmul.f32 %v642, 0.044715
        %v790 = vmul.f32 %v485, 0.044715
        %v791 = vmul.f32 %v487, 0.044715
        %v792 = vmul.f32 %v646, 0.044715
        %v793 = vmul.f32 %v648, 0.044715
        %v794 = vmul.f32 %v491, 0.044715
        %v795 = vmul.f32 %v493, 0.044715
        %v796 = vmul.f32 %v652, 0.044715
        %v797 = vmul.f32 %v654, 0.044715
        %v798 = vmul.f32 %v497, 0.044715
        %v799 = vmul.f32 %v499, 0.044715
        %v800 = vmul.f32 %v658, 0.044715
        %v801 = vmul.f32 %v660, 0.044715
        %v802 = vmul.f32 %v503, 0.044715
        %v803 = vmul.f32 %v505, 0.044715
        %v804 = vmul.f32 %v664, 0.044715
        %v805 = vmul.f32 %v666, 0.044715
        %v806 = vmul.f32 %v509, 0.044715
        %v807 = vmul.f32 %v511, 0.044715
        %v808 = vmul.f32 %v670, 0.044715
        %v809 = vmul.f32 %v672, 0.044715
        %v810 = vmul.f32 %v515, 0.044715
        %v811 = vmul.f32 %v517, 0.044715
        %v812 = vmul.f32 %v676, 0.044715
        %v813 = vmul.f32 %v678, 0.044715
        %v814 = vmul.f32 %v521, 0.044715
        %v815 = vmul.f32 %v523, 0.044715
        %v816 = vmul.f32 %v682, 0.044715
        %v817 = vmul.f32 %v684, 0.044715
        %v818 = vmul.f32 %v527, 0.044715
        %v819 = vmul.f32 %v529, 0.044715
        %v820 = vmul.f32 %v688, 0.044715
        %v821 = vmul.f32 %v690, 0.044715
        %v822 = vmul.f32 %v533, 0.044715
        %v823 = vmul.f32 %v535, 0.044715
        %v824 = vmul.f32 %v694, 0.044715
        %v825 = vmul.f32 %v696, 0.044715
        %v826 = vmul.f32 %v762, %v443
        %v827 = vmul.f32 %v763, %v445
        %v828 = vmul.f32 %v764, %v604
        %v829 = vmul.f32 %v765, %v606
        %v830 = vmul.f32 %v766, %v449
        %v831 = vmul.f32 %v767, %v451
        %v832 = vmul.f32 %v768, %v610
        %v833 = vmul.f32 %v769, %v612
        %v834 = vmul.f32 %v770, %v455
        %v835 = vmul.f32 %v771, %v457
        %v836 = vmul.f32 %v772, %v616
        %v837 = vmul.f32 %v773, %v618
        %v838 = vmul.f32 %v774, %v461
        %v839 = vmul.f32 %v775, %v463
        %v840 = vmul.f32 %v776, %v622
        %v841 = vmul.f32 %v777, %v624
        %v842 = vmul.f32 %v778, %v467
        %v843 = vmul.f32 %v779, %v469
        %v844 = vmul.f32 %v780, %v628
        %v845 = vmul.f32 %v781, %v630
        %v846 = vmul.f32 %v782, %v473
        %v847 = vmul.f32 %v783, %v475
        %v848 = vmul.f32 %v784, %v634
        %v849 = vmul.f32 %v785, %v636
        %v850 = vmul.f32 %v786, %v479
        %v851 = vmul.f32 %v787, %v481
        %v852 = vmul.f32 %v788, %v640
        %v853 = vmul.f32 %v789, %v642
        %v854 = vmul.f32 %v790, %v485
        %v855 = vmul.f32 %v791, %v487
        %v856 = vmul.f32 %v792, %v646
        %v857 = vmul.f32 %v793, %v648
        %v858 = vmul.f32 %v794, %v491
        %v859 = vmul.f32 %v795, %v493
        %v860 = vmul.f32 %v796, %v652
        %v861 = vmul.f32 %v797, %v654
        %v862 = vmul.f32 %v798, %v497
        %v863 = vmul.f32 %v799, %v499
        %v864 = vmul.f32 %v800, %v658
        %v865 = vmul.f32 %v801, %v660
        %v866 = vmul.f32 %v802, %v503
        %v867 = vmul.f32 %v803, %v505
        %v868 = vmul.f32 %v804, %v664
        %v869 = vmul.f32 %v805, %v666
        %v870 = vmul.f32 %v806, %v509
        %v871 = vmul.f32 %v807, %v511
        %v872 = vmul.f32 %v808, %v670
        %v873 = vmul.f32 %v809, %v672
        %v874 = vmul.f32 %v810, %v515
        %v875 = vmul.f32 %v811, %v517
        %v876 = vmul.f32 %v812, %v676
        %v877 = vmul.f32 %v813, %v678
        %v878 = vmul.f32 %v814, %v521
        %v879 = vmul.f32 %v815, %v523
        %v880 = vmul.f32 %v816, %v682
        %v881 = vmul.f32 %v817, %v684
        %v882 = vmul.f32 %v818, %v527
        %v883 = vmul.f32 %v819, %v529
        %v884 = vmul.f32 %v820, %v688
        %v885 = vmul.f32 %v821, %v690
        %v886 = vmul.f32 %v822, %v533
        %v887 = vmul.f32 %v823, %v535
        %v888 = vmul.f32 %v824, %v694
        %v889 = vmul.f32 %v825, %v696
        %v890 = vmul.f32 %v826, %v443
        %v891 = vmul.f32 %v827, %v445
        %v892 = vmul.f32 %v828, %v604
        %v893 = vmul.f32 %v829, %v606
        %v894 = vmul.f32 %v830, %v449
        %v895 = vmul.f32 %v831, %v451
        %v896 = vmul.f32 %v832, %v610
        %v897 = vmul.f32 %v833, %v612
        %v898 = vmul.f32 %v834, %v455
        %v899 = vmul.f32 %v835, %v457
        %v900 = vmul.f32 %v836, %v616
        %v901 = vmul.f32 %v837, %v618
        %v902 = vmul.f32 %v838, %v461
        %v903 = vmul.f32 %v839, %v463
        %v904 = vmul.f32 %v840, %v622
        %v905 = vmul.f32 %v841, %v624
        %v906 = vmul.f32 %v842, %v467
        %v907 = vmul.f32 %v843, %v469
        %v908 = vmul.f32 %v844, %v628
        %v909 = vmul.f32 %v845, %v630
        %v910 = vmul.f32 %v846, %v473
        %v911 = vmul.f32 %v847, %v475
        %v912 = vmul.f32 %v848, %v634
        %v913 = vmul.f32 %v849, %v636
        %v914 = vmul.f32 %v850, %v479
        %v915 = vmul.f32 %v851, %v481
        %v916 = vmul.f32 %v852, %v640
        %v917 = vmul.f32 %v853, %v642
        %v918 = vmul.f32 %v854, %v485
        %v919 = vmul.f32 %v855, %v487
        %v920 = vmul.f32 %v856, %v646
        %v921 = vmul.f32 %v857, %v648
        %v922 = vmul.f32 %v858, %v491
        %v923 = vmul.f32 %v859, %v493
        %v924 = vmul.f32 %v860, %v652
        %v925 = vmul.f32 %v861, %v654
        %v926 = vmul.f32 %v862, %v497
        %v927 = vmul.f32 %v863, %v499
        %v928 = vmul.f32 %v864, %v658
        %v929 = vmul.f32 %v865, %v660
        %v930 = vmul.f32 %v866, %v503
        %v931 = vmul.f32 %v867, %v505
        %v932 = vmul.f32 %v868, %v664
        %v933 = vmul.f32 %v869, %v666
        %v934 = vmul.f32 %v870, %v509
        %v935 = vmul.f32 %v871, %v511
        %v936 = vmul.f32 %v872, %v670
        %v937 = vmul.f32 %v873, %v672
        %v938 = vmul.f32 %v874, %v515
        %v939 = vmul.f32 %v875, %v517
        %v940 = vmul.f32 %v876, %v676
        %v941 = vmul.f32 %v877, %v678
        %v942 = vmul.f32 %v878, %v521
        %v943 = vmul.f32 %v879, %v523
        %v944 = vmul.f32 %v880, %v682
        %v945 = vmul.f32 %v881, %v684
        %v946 = vmul.f32 %v882, %v527
        %v947 = vmul.f32 %v883, %v529
        %v948 = vmul.f32 %v884, %v688
        %v949 = vmul.f32 %v885, %v690
        %v950 = vmul.f32 %v886, %v533
        %v951 = vmul.f32 %v887, %v535
        %v952 = vmul.f32 %v888, %v694
        %v953 = vmul.f32 %v889, %v696
        %v954 = vadd.f32 %v443, %v890
        %v955 = vadd.f32 %v445, %v891
        %v956 = vadd.f32 %v604, %v892
        %v957 = vadd.f32 %v606, %v893
        %v958 = vadd.f32 %v449, %v894
        %v959 = vadd.f32 %v451, %v895
        %v960 = vadd.f32 %v610, %v896
        %v961 = vadd.f32 %v612, %v897
        %v962 = vadd.f32 %v455, %v898
        %v963 = vadd.f32 %v457, %v899
        %v964 = vadd.f32 %v616, %v900
        %v965 = vadd.f32 %v618, %v901
        %v966 = vadd.f32 %v461, %v902
        %v967 = vadd.f32 %v463, %v903
        %v968 = vadd.f32 %v622, %v904
        %v969 = vadd.f32 %v624, %v905
        %v970 = vadd.f32 %v467, %v906
        %v971 = vadd.f32 %v469, %v907
        %v972 = vadd.f32 %v628, %v908
        %v973 = vadd.f32 %v630, %v909
        %v974 = vadd.f32 %v473, %v910
        %v975 = vadd.f32 %v475, %v911
        %v976 = vadd.f32 %v634, %v912
        %v977 = vadd.f32 %v636, %v913
        %v978 = vadd.f32 %v479, %v914
        %v979 = vadd.f32 %v481, %v915
        %v980 = vadd.f32 %v640, %v916
        %v981 = vadd.f32 %v642, %v917
        %v982 = vadd.f32 %v485, %v918
        %v983 = vadd.f32 %v487, %v919
        %v984 = vadd.f32 %v646, %v920
        %v985 = vadd.f32 %v648, %v921
        %v986 = vadd.f32 %v491, %v922
        %v987 = vadd.f32 %v493, %v923
        %v988 = vadd.f32 %v652, %v924
        %v989 = vadd.f32 %v654, %v925
        %v990 = vadd.f32 %v497, %v926
        %v991 = vadd.f32 %v499, %v927
        %v992 = vadd.f32 %v658, %v928
        %v993 = vadd.f32 %v660, %v929
        %v994 = vadd.f32 %v503, %v930
        %v995 = vadd.f32 %v505, %v931
        %v996 = vadd.f32 %v664, %v932
        %v997 = vadd.f32 %v666, %v933
        %v998 = vadd.f32 %v509, %v934
        %v999 = vadd.f32 %v511, %v935
        %v1000 = vadd.f32 %v670, %v936
        %v1001 = vadd.f32 %v672, %v937
        %v1002 = vadd.f32 %v515, %v938
        %v1003 = vadd.f32 %v517, %v939
        %v1004 = vadd.f32 %v676, %v940
        %v1005 = vadd.f32 %v678, %v941
        %v1006 = vadd.f32 %v521, %v942
        %v1007 = vadd.f32 %v523, %v943
        %v1008 = vadd.f32 %v682, %v944
        %v1009 = vadd.f32 %v684, %v945
        %v1010 = vadd.f32 %v527, %v946
        %v1011 = vadd.f32 %v529, %v947
        %v1012 = vadd.f32 %v688, %v948
        %v1013 = vadd.f32 %v690, %v949
        %v1014 = vadd.f32 %v533, %v950
        %v1015 = vadd.f32 %v535, %v951
        %v1016 = vadd.f32 %v694, %v952
        %v1017 = vadd.f32 %v696, %v953
        %v1018 = vmul.f32 %v954, 0.7978846
        %v1019 = vmul.f32 %v955, 0.7978846
        %v1020 = vmul.f32 %v956, 0.7978846
        %v1021 = vmul.f32 %v957, 0.7978846
        %v1022 = vmul.f32 %v958, 0.7978846
        %v1023 = vmul.f32 %v959, 0.7978846
        %v1024 = vmul.f32 %v960, 0.7978846
        %v1025 = vmul.f32 %v961, 0.7978846
        %v1026 = vmul.f32 %v962, 0.7978846
        %v1027 = vmul.f32 %v963, 0.7978846
        %v1028 = vmul.f32 %v964, 0.7978846
        %v1029 = vmul.f32 %v965, 0.7978846
        %v1030 = vmul.f32 %v966, 0.7978846
        %v1031 = vmul.f32 %v967, 0.7978846
        %v1032 = vmul.f32 %v968, 0.7978846
        %v1033 = vmul.f32 %v969, 0.7978846
        %v1034 = vmul.f32 %v970, 0.7978846
        %v1035 = vmul.f32 %v971, 0.7978846
        %v1036 = vmul.f32 %v972, 0.7978846
        %v1037 = vmul.f32 %v973, 0.7978846
        %v1038 = vmul.f32 %v974, 0.7978846
        %v1039 = vmul.f32 %v975, 0.7978846
        %v1040 = vmul.f32 %v976, 0.7978846
        %v1041 = vmul.f32 %v977, 0.7978846
        %v1042 = vmul.f32 %v978, 0.7978846
        %v1043 = vmul.f32 %v979, 0.7978846
        %v1044 = vmul.f32 %v980, 0.7978846
        %v1045 = vmul.f32 %v981, 0.7978846
        %v1046 = vmul.f32 %v982, 0.7978846
        %v1047 = vmul.f32 %v983, 0.7978846
        %v1048 = vmul.f32 %v984, 0.7978846
        %v1049 = vmul.f32 %v985, 0.7978846
        %v1050 = vmul.f32 %v986, 0.7978846
        %v1051 = vmul.f32 %v987, 0.7978846
        %v1052 = vmul.f32 %v988, 0.7978846
        %v1053 = vmul.f32 %v989, 0.7978846
        %v1054 = vmul.f32 %v990, 0.7978846
        %v1055 = vmul.f32 %v991, 0.7978846
        %v1056 = vmul.f32 %v992, 0.7978846
        %v1057 = vmul.f32 %v993, 0.7978846
        %v1058 = vmul.f32 %v994, 0.7978846
        %v1059 = vmul.f32 %v995, 0.7978846
        %v1060 = vmul.f32 %v996, 0.7978846
        %v1061 = vmul.f32 %v997, 0.7978846
        %v1062 = vmul.f32 %v998, 0.7978846
        %v1063 = vmul.f32 %v999, 0.7978846
        %v1064 = vmul.f32 %v1000, 0.7978846
        %v1065 = vmul.f32 %v1001, 0.7978846
        %v1066 = vmul.f32 %v1002, 0.7978846
        %v1067 = vmul.f32 %v1003, 0.7978846
        %v1068 = vmul.f32 %v1004, 0.7978846
        %v1069 = vmul.f32 %v1005, 0.7978846
        %v1070 = vmul.f32 %v1006, 0.7978846
        %v1071 = vmul.f32 %v1007, 0.7978846
        %v1072 = vmul.f32 %v1008, 0.7978846
        %v1073 = vmul.f32 %v1009, 0.7978846
        %v1074 = vmul.f32 %v1010, 0.7978846
        %v1075 = vmul.f32 %v1011, 0.7978846
        %v1076 = vmul.f32 %v1012, 0.7978846
        %v1077 = vmul.f32 %v1013, 0.7978846
        %v1078 = vmul.f32 %v1014, 0.7978846
        %v1079 = vmul.f32 %v1015, 0.7978846
        %v1080 = vmul.f32 %v1016, 0.7978846
        %v1081 = vmul.f32 %v1017, 0.7978846
        %v1082 = vtanh.pop %v1018
        %v1083 = vtanh.pop %v1019
        %v1084 = vtanh.pop %v1020
        %v1085 = vtanh.pop %v1021
        %v1086 = vtanh.pop %v1022
        %v1087 = vtanh.pop %v1023
        %v1088 = vtanh.pop %v1024
        %v1089 = vtanh.pop %v1025
        %v1090 = vtanh.pop %v1026
        %v1091 = vtanh.pop %v1027
        %v1092 = vtanh.pop %v1028
        %v1093 = vtanh.pop %v1029
        %v1094 = vtanh.pop %v1030
        %v1095 = vtanh.pop %v1031
        %v1096 = vtanh.pop %v1032
        %v1097 = vtanh.pop %v1033
        %v1098 = vtanh.pop %v1034
        %v1099 = vtanh.pop %v1035
        %v1100 = vtanh.pop %v1036
        %v1101 = vtanh.pop %v1037
        %v1102 = vtanh.pop %v1038
        %v1103 = vtanh.pop %v1039
        %v1104 = vtanh.pop %v1040
        %v1105 = vtanh.pop %v1041
        %v1106 = vtanh.pop %v1042
        %v1107 = vtanh.pop %v1043
        %v1108 = vtanh.pop %v1044
        %v1109 = vtanh.pop %v1045
        %v1110 = vtanh.pop %v1046
        %v1111 = vtanh.pop %v1047
        %v1112 = vtanh.pop %v1048
        %v1113 = vtanh.pop %v1049
        %v1114 = vtanh.pop %v1050
        %v1115 = vtanh.pop %v1051
        %v1116 = vtanh.pop %v1052
        %v1117 = vtanh.pop %v1053
        %v1118 = vtanh.pop %v1054
        %v1119 = vtanh.pop %v1055
        %v1120 = vtanh.pop %v1056
        %v1121 = vtanh.pop %v1057
        %v1122 = vtanh.pop %v1058
        %v1123 = vtanh.pop %v1059
        %v1124 = vtanh.pop %v1060
        %v1125 = vtanh.pop %v1061
        %v1126 = vtanh.pop %v1062
        %v1127 = vtanh.pop %v1063
        %v1128 = vtanh.pop %v1064
        %v1129 = vtanh.pop %v1065
        %v1130 = vtanh.pop %v1066
        %v1131 = vtanh.pop %v1067
        %v1132 = vtanh.pop %v1068
        %v1133 = vtanh.pop %v1069
        %v1134 = vtanh.pop %v1070
        %v1135 = vtanh.pop %v1071
        %v1136 = vtanh.pop %v1072
        %v1137 = vtanh.pop %v1073
        %v1138 = vtanh.pop %v1074
        %v1139 = vtanh.pop %v1075
        %v1140 = vtanh.pop %v1076
        %v1141 = vtanh.pop %v1077
        %v1142 = vtanh.pop %v1078
        %v1143 = vtanh.pop %v1079
        %v1144 = vtanh.pop %v1080
        %v1145 = vtanh.pop %v1081
        %v1146 = vadd.f32 %v1082, 1.0
        %v1147 = vadd.f32 %v1083, 1.0
        %v1148 = vadd.f32 %v1084, 1.0
        %v1149 = vadd.f32 %v1085, 1.0
        %v1150 = vadd.f32 %v1086, 1.0
        %v1151 = vadd.f32 %v1087, 1.0
        %v1152 = vadd.f32 %v1088, 1.0
        %v1153 = vadd.f32 %v1089, 1.0
        %v1154 = vadd.f32 %v1090, 1.0
        %v1155 = vadd.f32 %v1091, 1.0
        %v1156 = vadd.f32 %v1092, 1.0
        %v1157 = vadd.f32 %v1093, 1.0
        %v1158 = vadd.f32 %v1094, 1.0
        %v1159 = vadd.f32 %v1095, 1.0
        %v1160 = vadd.f32 %v1096, 1.0
        %v1161 = vadd.f32 %v1097, 1.0
        %v1162 = vadd.f32 %v1098, 1.0
        %v1163 = vadd.f32 %v1099, 1.0
        %v1164 = vadd.f32 %v1100, 1.0
        %v1165 = vadd.f32 %v1101, 1.0
        %v1166 = vadd.f32 %v1102, 1.0
        %v1167 = vadd.f32 %v1103, 1.0
        %v1168 = vadd.f32 %v1104, 1.0
        %v1169 = vadd.f32 %v1105, 1.0
        %v1170 = vadd.f32 %v1106, 1.0
        %v1171 = vadd.f32 %v1107, 1.0
        %v1172 = vadd.f32 %v1108, 1.0
        %v1173 = vadd.f32 %v1109, 1.0
        %v1174 = vadd.f32 %v1110, 1.0
        %v1175 = vadd.f32 %v1111, 1.0
        %v1176 = vadd.f32 %v1112, 1.0
        %v1177 = vadd.f32 %v1113, 1.0
        %v1178 = vadd.f32 %v1114, 1.0
        %v1179 = vadd.f32 %v1115, 1.0
        %v1180 = vadd.f32 %v1116, 1.0
        %v1181 = vadd.f32 %v1117, 1.0
        %v1182 = vadd.f32 %v1118, 1.0
        %v1183 = vadd.f32 %v1119, 1.0
        %v1184 = vadd.f32 %v1120, 1.0
        %v1185 = vadd.f32 %v1121, 1.0
        %v1186 = vadd.f32 %v1122, 1.0
        %v1187 = vadd.f32 %v1123, 1.0
        %v1188 = vadd.f32 %v1124, 1.0
        %v1189 = vadd.f32 %v1125, 1.0
        %v1190 = vadd.f32 %v1126, 1.0
        %v1191 = vadd.f32 %v1127, 1.0
        %v1192 = vadd.f32 %v1128, 1.0
        %v1193 = vadd.f32 %v1129, 1.0
        %v1194 = vadd.f32 %v1130, 1.0
        %v1195 = vadd.f32 %v1131, 1.0
        %v1196 = vadd.f32 %v1132, 1.0
        %v1197 = vadd.f32 %v1133, 1.0
        %v1198 = vadd.f32 %v1134, 1.0
        %v1199 = vadd.f32 %v1135, 1.0
        %v1200 = vadd.f32 %v1136, 1.0
        %v1201 = vadd.f32 %v1137, 1.0
        %v1202 = vadd.f32 %v1138, 1.0
        %v1203 = vadd.f32 %v1139, 1.0
        %v1204 = vadd.f32 %v1140, 1.0
        %v1205 = vadd.f32 %v1141, 1.0
        %v1206 = vadd.f32 %v1142, 1.0
        %v1207 = vadd.f32 %v1143, 1.0
        %v1208 = vadd.f32 %v1144, 1.0
        %v1209 = vadd.f32 %v1145, 1.0
        %v1210 = vmul.f32 %v698, %v1146
        %v1211 = vmul.f32 %v699, %v1147
        %v1212 = vmul.f32 %v700, %v1148
        %v1213 = vmul.f32 %v701, %v1149
        %v1214 = vmul.f32 %v702, %v1150
        %v1215 = vmul.f32 %v703, %v1151
        %v1216 = vmul.f32 %v704, %v1152
        %v1217 = vmul.f32 %v705, %v1153
        %v1218 = vmul.f32 %v706, %v1154
        %v1219 = vmul.f32 %v707, %v1155
        %v1220 = vmul.f32 %v708, %v1156
        %v1221 = vmul.f32 %v709, %v1157
        %v1222 = vmul.f32 %v710, %v1158
        %v1223 = vmul.f32 %v711, %v1159
        %v1224 = vmul.f32 %v712, %v1160
        %v1225 = vmul.f32 %v713, %v1161
        %v1226 = vmul.f32 %v714, %v1162
        %v1227 = vmul.f32 %v715, %v1163
        %v1228 = vmul.f32 %v716, %v1164
        %v1229 = vmul.f32 %v717, %v1165
        %v1230 = vmul.f32 %v718, %v1166
        %v1231 = vmul.f32 %v719, %v1167
        %v1232 = vmul.f32 %v720, %v1168
        %v1233 = vmul.f32 %v721, %v1169
        %v1234 = vmul.f32 %v722, %v1170
        %v1235 = vmul.f32 %v723, %v1171
        %v1236 = vmul.f32 %v724, %v1172
        %v1237 = vmul.f32 %v725, %v1173
        %v1238 = vmul.f32 %v726, %v1174
        %v1239 = vmul.f32 %v727, %v1175
        %v1240 = vmul.f32 %v728, %v1176
        %v1241 = vmul.f32 %v729, %v1177
        %v1242 = vmul.f32 %v730, %v1178
        %v1243 = vmul.f32 %v731, %v1179
        %v1244 = vmul.f32 %v732, %v1180
        %v1245 = vmul.f32 %v733, %v1181
        %v1246 = vmul.f32 %v734, %v1182
        %v1247 = vmul.f32 %v735, %v1183
        %v1248 = vmul.f32 %v736, %v1184
        %v1249 = vmul.f32 %v737, %v1185
        %v1250 = vmul.f32 %v738, %v1186
        %v1251 = vmul.f32 %v739, %v1187
        %v1252 = vmul.f32 %v740, %v1188
        %v1253 = vmul.f32 %v741, %v1189
        %v1254 = vmul.f32 %v742, %v1190
        %v1255 = vmul.f32 %v743, %v1191
        %v1256 = vmul.f32 %v744, %v1192
        %v1257 = vmul.f32 %v745, %v1193
        %v1258 = vmul.f32 %v746, %v1194
        %v1259 = vmul.f32 %v747, %v1195
        %v1260 = vmul.f32 %v748, %v1196
        %v1261 = vmul.f32 %v749, %v1197
        %v1262 = vmul.f32 %v750, %v1198
        %v1263 = vmul.f32 %v751, %v1199
        %v1264 = vmul.f32 %v752, %v1200
        %v1265 = vmul.f32 %v753, %v1201
        %v1266 = vmul.f32 %v754, %v1202
        %v1267 = vmul.f32 %v755, %v1203
        %v1268 = vmul.f32 %v756, %v1204
        %v1269 = vmul.f32 %v757, %v1205
        %v1270 = vmul.f32 %v758, %v1206
        %v1271 = vmul.f32 %v759, %v1207
        %v1272 = vmul.f32 %v760, %v1208
        %v1273 = vmul.f32 %v761, %v1209
        %v1274 = vld [vmem:[#allocation7] sm:$0xff]
        %v1275 = vld [vmem:[#allocation7 + $0x8] sm:$0xff]
        %v1276 = vld [vmem:[#allocation7 + $0x10] sm:$0xff]
        %v1277 = vld [vmem:[#allocation7 + $0x18] sm:$0xff]
        %v1278 = vld [vmem:[#allocation7 + $0x20] sm:$0xff]
        %v1279 = vld [vmem:[#allocation7 + $0x28] sm:$0xff]
        %v1280 = vld [vmem:[#allocation7 + $0x30] sm:$0xff]
        %v1281 = vld [vmem:[#allocation7 + $0x38] sm:$0xff]
        %v1282 = vld [vmem:[#allocation7 + $0x40] sm:$0xff]
        %v1283 = vld [vmem:[#allocation7 + $0x48] sm:$0xff]
        %v1284 = vld [vmem:[#allocation7 + $0x50] sm:$0xff]
        %v1285 = vld [vmem:[#allocation7 + $0x58] sm:$0xff]
        %v1286 = vld [vmem:[#allocation7 + $0x60] sm:$0xff]
        %v1287 = vld [vmem:[#allocation7 + $0x68] sm:$0xff]
        %v1288 = vld [vmem:[#allocation7 + $0x70] sm:$0xff]
        %v1289 = vld [vmem:[#allocation7 + $0x78] sm:$0xff]
        %v1290 = vld [vmem:[#allocation7 + $0x80] sm:$0xff]
        %v1291 = vld [vmem:[#allocation7 + $0x88] sm:$0xff]
        %v1292 = vld [vmem:[#allocation7 + $0x90] sm:$0xff]
        %v1293 = vld [vmem:[#allocation7 + $0x98] sm:$0xff]
        %v1294 = vld [vmem:[#allocation7 + $0xa0] sm:$0xff]
        %v1295 = vld [vmem:[#allocation7 + $0xa8] sm:$0xff]
        %v1296 = vld [vmem:[#allocation7 + $0xb0] sm:$0xff]
        %v1297 = vld [vmem:[#allocation7 + $0xb8] sm:$0xff]
        %v1298 = vld [vmem:[#allocation7 + $0xc0] sm:$0xff]
        %v1299 = vld [vmem:[#allocation7 + $0xc8] sm:$0xff]
        %v1300 = vld [vmem:[#allocation7 + $0xd0] sm:$0xff]
        %v1301 = vld [vmem:[#allocation7 + $0xd8] sm:$0xff]
        %v1302 = vld [vmem:[#allocation7 + $0xe0] sm:$0xff]
        %v1303 = vld [vmem:[#allocation7 + $0xe8] sm:$0xff]
        %v1304 = vld [vmem:[#allocation7 + $0xf0] sm:$0xff]
        %v1305 = vld [vmem:[#allocation7 + $0xf8] sm:$0xff]
        %v1306 = vld [vmem:[#allocation7 + $0x100] sm:$0xff]
        %v1307 = vld [vmem:[#allocation7 + $0x108] sm:$0xff]
        %v1308 = vld [vmem:[#allocation7 + $0x110] sm:$0xff]
        %v1309 = vld [vmem:[#allocation7 + $0x118] sm:$0xff]
        %v1310 = vld [vmem:[#allocation7 + $0x120] sm:$0xff]
        %v1311 = vld [vmem:[#allocation7 + $0x128] sm:$0xff]
        %v1312 = vld [vmem:[#allocation7 + $0x130] sm:$0xff]
        %v1313 = vld [vmem:[#allocation7 + $0x138] sm:$0xff]
        %v1314 = vld [vmem:[#allocation7 + $0x140] sm:$0xff]
        %v1315 = vld [vmem:[#allocation7 + $0x148] sm:$0xff]
        %v1316 = vld [vmem:[#allocation7 + $0x150] sm:$0xff]
        %v1317 = vld [vmem:[#allocation7 + $0x158] sm:$0xff]
        %v1318 = vld [vmem:[#allocation7 + $0x160] sm:$0xff]
        %v1319 = vld [vmem:[#allocation7 + $0x168] sm:$0xff]
        %v1320 = vld [vmem:[#allocation7 + $0x170] sm:$0xff]
        %v1321 = vld [vmem:[#allocation7 + $0x178] sm:$0xff]
        %v1322 = vld [vmem:[#allocation7 + $0x180] sm:$0xff]
        %v1323 = vld [vmem:[#allocation7 + $0x188] sm:$0xff]
        %v1324 = vld [vmem:[#allocation7 + $0x190] sm:$0xff]
        %v1325 = vld [vmem:[#allocation7 + $0x198] sm:$0xff]
        %v1326 = vld [vmem:[#allocation7 + $0x1a0] sm:$0xff]
        %v1327 = vld [vmem:[#allocation7 + $0x1a8] sm:$0xff]
        %v1328 = vld [vmem:[#allocation7 + $0x1b0] sm:$0xff]
        %v1329 = vld [vmem:[#allocation7 + $0x1b8] sm:$0xff]
        %v1330 = vld [vmem:[#allocation7 + $0x1c0] sm:$0xff]
        %v1331 = vld [vmem:[#allocation7 + $0x1c8] sm:$0xff]
        %v1332 = vld [vmem:[#allocation7 + $0x1d0] sm:$0xff]
        %v1333 = vld [vmem:[#allocation7 + $0x1d8] sm:$0xff]
        %v1334 = vld [vmem:[#allocation7 + $0x1e0] sm:$0xff]
        %v1335 = vld [vmem:[#allocation7 + $0x1e8] sm:$0xff]
        %v1336 = vld [vmem:[#allocation7 + $0x1f0] sm:$0xff]
        %v1337 = vld [vmem:[#allocation7 + $0x1f8] sm:$0xff]
        %v1338 = vld [vmem:[%s4] sm:$0x1]
        %v1340 = vlaneseq
        %v1341 = vshrl.u32 %v1340, 7
        %v1342 = vsub.s32 0, %v1341
        %v1343 = vrot.slane %v1338, %v1342
        %1345 = vmatprep.subr.mxu0 0.0
        %1346 = vmatpush1.msra.mxu0 %v1274
        %1347 = vmatprep.subr.mxu0 0.0
        %1348 = vmatpush1.msra.mxu0 %v1275
        %1349 = vmatprep.subr.mxu0 0.0
        %1350 = vmatpush1.msra.mxu0 %v1276
        %1351 = vmatprep.subr.mxu0 0.0
        %1352 = vmatpush1.msra.mxu0 %v1277
        %1353 = vmatprep.subr.mxu0 0.0
        %1354 = vmatpush1.msra.mxu0 %v1278
        %1355 = vmatprep.subr.mxu0 0.0
        %1356 = vmatpush1.msra.mxu0 %v1279
        %1357 = vmatprep.subr.mxu0 0.0
        %1358 = vmatpush1.msra.mxu0 %v1280
        %1359 = vmatprep.subr.mxu0 0.0
        %1360 = vmatpush1.msra.mxu0 %v1281
        %1361 = vmatprep.subr.mxu0 0.0
        %1362 = vmatpush1.msra.mxu0 %v1282
        %1363 = vmatprep.subr.mxu0 0.0
        %1364 = vmatpush1.msra.mxu0 %v1283
        %1365 = vmatprep.subr.mxu0 0.0
        %1366 = vmatpush1.msra.mxu0 %v1284
        %1367 = vmatprep.subr.mxu0 0.0
        %1368 = vmatpush1.msra.mxu0 %v1285
        %1369 = vmatprep.subr.mxu0 0.0
        %1370 = vmatpush1.msra.mxu0 %v1286
        %1371 = vmatprep.subr.mxu0 0.0
        %1372 = vmatpush1.msra.mxu0 %v1287
        %1373 = vmatprep.subr.mxu0 0.0
        %1374 = vmatpush1.msra.mxu0 %v1288
        %1375 = vmatprep.subr.mxu0 0.0
        %1376 = vmatpush1.msra.mxu0 %v1289
        %1377 = vmatprep.subr.mxu0 0.0
        %1378 = vmatpush1.msra.mxu0 %v1290
        %1379 = vmatprep.subr.mxu0 0.0
        %1380 = vmatpush1.msra.mxu0 %v1291
        %1381 = vmatprep.subr.mxu0 0.0
        %1382 = vmatpush1.msra.mxu0 %v1292
        %1383 = vmatprep.subr.mxu0 0.0
        %1384 = vmatpush1.msra.mxu0 %v1293
        %1385 = vmatprep.subr.mxu0 0.0
        %1386 = vmatpush1.msra.mxu0 %v1294
        %1387 = vmatprep.subr.mxu0 0.0
        %1388 = vmatpush1.msra.mxu0 %v1295
        %1389 = vmatprep.subr.mxu0 0.0
        %1390 = vmatpush1.msra.mxu0 %v1296
        %1391 = vmatprep.subr.mxu0 0.0
        %1392 = vmatpush1.msra.mxu0 %v1297
        %1393 = vmatprep.subr.mxu0 0.0
        %1394 = vmatpush1.msra.mxu0 %v1298
        %1395 = vmatprep.subr.mxu0 0.0
        %1396 = vmatpush1.msra.mxu0 %v1299
        %1397 = vmatprep.subr.mxu0 0.0
        %1398 = vmatpush1.msra.mxu0 %v1300
        %1399 = vmatprep.subr.mxu0 0.0
        %1400 = vmatpush1.msra.mxu0 %v1301
        %1401 = vmatprep.subr.mxu0 0.0
        %1402 = vmatpush1.msra.mxu0 %v1302
        %1403 = vmatprep.subr.mxu0 0.0
        %1404 = vmatpush1.msra.mxu0 %v1303
        %1405 = vmatprep.subr.mxu0 0.0
        %1406 = vmatpush1.msra.mxu0 %v1304
        %1407 = vmatprep.subr.mxu0 0.0
        %1408 = vmatpush1.msra.mxu0 %v1305
        %1409 = vmatprep.mubr.f32.mxu0 %v1211
        %1410 = vmatmul.mubr.f32.gmra.mrb[0].mxu0 %v1210
        %v1411 = vpop.f32.mrb[0].mxu0
        %v1412 = vadd.f32 %v1343, %v1411
        %v1413 = vpop.f32.mrb[0].mxu0
        %1414 = vmatprep.mubr.f32.mxu0 %v1215
        %1415 = vmatmul.mubr.f32.gmra.mrb[0].mxu0 %v1214
        %v1416 = vpop.f32.mrb[0].mxu0
        %v1417 = vadd.f32 %v1343, %v1416
        %v1418 = vpop.f32.mrb[0].mxu0
        %1419 = vmatprep.mubr.f32.mxu0 %v1219
        %1420 = vmatmul.mubr.f32.gmra.mrb[0].mxu0 %v1218
        %v1421 = vpop.f32.mrb[0].mxu0
        %v1422 = vadd.f32 %v1343, %v1421
        %v1423 = vpop.f32.mrb[0].mxu0
        %1424 = vmatprep.mubr.f32.mxu0 %v1223
        %1425 = vmatmul.mubr.f32.gmra.mrb[0].mxu0 %v1222
        %v1426 = vpop.f32.mrb[0].mxu0
        %v1427 = vadd.f32 %v1343, %v1426
        %v1428 = vpop.f32.mrb[0].mxu0
        %1429 = vmatprep.mubr.f32.mxu0 %v1227
        %1430 = vmatmul.mubr.f32.gmra.mrb[0].mxu0 %v1226
        %v1431 = vpop.f32.mrb[0].mxu0
        %v1432 = vadd.f32 %v1343, %v1431
        %v1433 = vpop.f32.mrb[0].mxu0
        %1434 = vmatprep.mubr.f32.mxu0 %v1231
        %1435 = vmatmul.mubr.f32.gmra.mrb[0].mxu0 %v1230
        %v1436 = vpop.f32.mrb[0].mxu0
        %v1437 = vadd.f32 %v1343, %v1436
        %v1438 = vpop.f32.mrb[0].mxu0
        %1439 = vmatprep.mubr.f32.mxu0 %v1235
        %1440 = vmatmul.mubr.f32.gmra.mrb[0].mxu0 %v1234
        %v1441 = vpop.f32.mrb[0].mxu0
        %v1442 = vadd.f32 %v1343, %v1441
        %v1443 = vpop.f32.mrb[0].mxu0
        %1444 = vmatprep.mubr.f32.mxu0 %v1239
        %1445 = vmatmul.mubr.f32.gmra.mrb[0].mxu0 %v1238
        %v1446 = vpop.f32.mrb[0].mxu0
        %v1447 = vadd.f32 %v1343, %v1446
        %v1448 = vpop.f32.mrb[0].mxu0
        %1449 = vmatprep.mubr.f32.mxu0 %v1243
        %1450 = vmatmul.mubr.f32.gmra.mrb[0].mxu0 %v1242
        %v1451 = vpop.f32.mrb[0].mxu0
        %v1452 = vadd.f32 %v1343, %v1451
        %v1453 = vpop.f32.mrb[0].mxu0
        %1454 = vmatprep.mubr.f32.mxu0 %v1247
        %1455 = vmatmul.mubr.f32.gmra.mrb[0].mxu0 %v1246
        %v1456 = vpop.f32.mrb[0].mxu0
        %v1457 = vadd.f32 %v1343, %v1456
        %v1458 = vpop.f32.mrb[0].mxu0
        %1459 = vmatprep.mubr.f32.mxu0 %v1251
        %1460 = vmatmul.mubr.f32.gmra.mrb[0].mxu0 %v1250
        %v1461 = vpop.f32.mrb[0].mxu0
        %v1462 = vadd.f32 %v1343, %v1461
        %v1463 = vpop.f32.mrb[0].mxu0
        %1464 = vmatprep.mubr.f32.mxu0 %v1255
        %1465 = vmatmul.mubr.f32.gmra.mrb[0].mxu0 %v1254
        %v1466 = vpop.f32.mrb[0].mxu0
        %v1467 = vadd.f32 %v1343, %v1466
        %v1468 = vpop.f32.mrb[0].mxu0
        %1469 = vmatprep.mubr.f32.mxu0 %v1259
        %1470 = vmatmul.mubr.f32.gmra.mrb[0].mxu0 %v1258
        %v1471 = vpop.f32.mrb[0].mxu0
        %v1472 = vadd.f32 %v1343, %v1471
        %v1473 = vpop.f32.mrb[0].mxu0
        %1474 = vmatprep.mubr.f32.mxu0 %v1263
        %1475 = vmatmul.mubr.f32.gmra.mrb[0].mxu0 %v1262
        %v1476 = vpop.f32.mrb[0].mxu0
        %v1477 = vadd.f32 %v1343, %v1476
        %v1478 = vpop.f32.mrb[0].mxu0
        %1479 = vmatprep.mubr.f32.mxu0 %v1267
        %1480 = vmatmul.mubr.f32.gmra.mrb[0].mxu0 %v1266
        %v1481 = vpop.f32.mrb[0].mxu0
        %v1482 = vadd.f32 %v1343, %v1481
        %v1483 = vpop.f32.mrb[0].mxu0
        %1484 = vmatprep.mubr.f32.mxu0 %v1271
        %1485 = vmatmul.mubr.f32.gmra.mrb[0].mxu0 %v1270
        %v1486 = vpop.f32.mrb[0].mxu0
        %v1487 = vadd.f32 %v1343, %v1486
        %v1488 = vpop.f32.mrb[0].mxu0
        %1489 = vdwg.mxu0
        %1490 = vmatprep.subr.mxu0 0.0
        %1491 = vmatpush1.msra.mxu0 %v1306
        %1492 = vmatprep.subr.mxu0 0.0
        %1493 = vmatpush1.msra.mxu0 %v1307
        %1494 = vmatprep.subr.mxu0 0.0
        %1495 = vmatpush1.msra.mxu0 %v1308
        %1496 = vmatprep.subr.mxu0 0.0
        %1497 = vmatpush1.msra.mxu0 %v1309
        %1498 = vmatprep.subr.mxu0 0.0
        %1499 = vmatpush1.msra.mxu0 %v1310
        %1500 = vmatprep.subr.mxu0 0.0
        %1501 = vmatpush1.msra.mxu0 %v1311
        %1502 = vmatprep.subr.mxu0 0.0
        %1503 = vmatpush1.msra.mxu0 %v1312
        %1504 = vmatprep.subr.mxu0 0.0
        %1505 = vmatpush1.msra.mxu0 %v1313
        %1506 = vmatprep.subr.mxu0 0.0
        %1507 = vmatpush1.msra.mxu0 %v1314
        %1508 = vmatprep.subr.mxu0 0.0
        %1509 = vmatpush1.msra.mxu0 %v1315
        %1510 = vmatprep.subr.mxu0 0.0
        %1511 = vmatpush1.msra.mxu0 %v1316
        %1512 = vmatprep.subr.mxu0 0.0
        %1513 = vmatpush1.msra.mxu0 %v1317
        %1514 = vmatprep.subr.mxu0 0.0
        %1515 = vmatpush1.msra.mxu0 %v1318
        %1516 = vmatprep.subr.mxu0 0.0
        %1517 = vmatpush1.msra.mxu0 %v1319
        %1518 = vmatprep.subr.mxu0 0.0
        %1519 = vmatpush1.msra.mxu0 %v1320
        %1520 = vmatprep.subr.mxu0 0.0
        %1521 = vmatpush1.msra.mxu0 %v1321
        %1522 = vmatprep.subr.mxu0 0.0
        %1523 = vmatpush1.msra.mxu0 %v1322
        %1524 = vmatprep.subr.mxu0 0.0
        %1525 = vmatpush1.msra.mxu0 %v1323
        %1526 = vmatprep.subr.mxu0 0.0
        %1527 = vmatpush1.msra.mxu0 %v1324
        %1528 = vmatprep.subr.mxu0 0.0
        %1529 = vmatpush1.msra.mxu0 %v1325
        %1530 = vmatprep.subr.mxu0 0.0
        %1531 = vmatpush1.msra.mxu0 %v1326
        %1532 = vmatprep.subr.mxu0 0.0
        %1533 = vmatpush1.msra.mxu0 %v1327
        %1534 = vmatprep.subr.mxu0 0.0
        %1535 = vmatpush1.msra.mxu0 %v1328
        %1536 = vmatprep.subr.mxu0 0.0
        %1537 = vmatpush1.msra.mxu0 %v1329
        %1538 = vmatprep.subr.mxu0 0.0
        %1539 = vmatpush1.msra.mxu0 %v1330
        %1540 = vmatprep.subr.mxu0 0.0
        %1541 = vmatpush1.msra.mxu0 %v1331
        %1542 = vmatprep.subr.mxu0 0.0
        %1543 = vmatpush1.msra.mxu0 %v1332
        %1544 = vmatprep.subr.mxu0 0.0
        %1545 = vmatpush1.msra.mxu0 %v1333
        %1546 = vmatprep.subr.mxu0 0.0
        %1547 = vmatpush1.msra.mxu0 %v1334
        %1548 = vmatprep.subr.mxu0 0.0
        %1549 = vmatpush1.msra.mxu0 %v1335
        %1550 = vmatprep.subr.mxu0 0.0
        %1551 = vmatpush1.msra.mxu0 %v1336
        %1552 = vmatprep.subr.mxu0 0.0
        %1553 = vmatpush1.msra.mxu0 %v1337
        %1554 = vmatprep.mubr.f32.mxu0 %v1213
        %1555 = vmatmul.mubr.f32.gmra.mrb[0].mxu0 %v1212
        %v1556 = vpop.f32.mrb[0].mxu0
        %v1557 = vadd.f32 %v1412, %v1556
        %v1558 = vpop.f32.mrb[0].mxu0
        %1559 = vmatprep.mubr.f32.mxu0 %v1217
        %1560 = vmatmul.mubr.f32.gmra.mrb[0].mxu0 %v1216
        %v1561 = vpop.f32.mrb[0].mxu0
        %v1562 = vadd.f32 %v1417, %v1561
        %v1563 = vpop.f32.mrb[0].mxu0
        %1564 = vmatprep.mubr.f32.mxu0 %v1221
        %1565 = vmatmul.mubr.f32.gmra.mrb[0].mxu0 %v1220
        %v1566 = vpop.f32.mrb[0].mxu0
        %v1567 = vadd.f32 %v1422, %v1566
        %v1568 = vpop.f32.mrb[0].mxu0
        %1569 = vmatprep.mubr.f32.mxu0 %v1225
        %1570 = vmatmul.mubr.f32.gmra.mrb[0].mxu0 %v1224
        %v1571 = vpop.f32.mrb[0].mxu0
        %v1572 = vadd.f32 %v1427, %v1571
        %v1573 = vpop.f32.mrb[0].mxu0
        %1574 = vmatprep.mubr.f32.mxu0 %v1229
        %1575 = vmatmul.mubr.f32.gmra.mrb[0].mxu0 %v1228
        %v1576 = vpop.f32.mrb[0].mxu0
        %v1577 = vadd.f32 %v1432, %v1576
        %v1578 = vpop.f32.mrb[0].mxu0
        %1579 = vmatprep.mubr.f32.mxu0 %v1233
        %1580 = vmatmul.mubr.f32.gmra.mrb[0].mxu0 %v1232
        %v1581 = vpop.f32.mrb[0].mxu0
        %v1582 = vadd.f32 %v1437, %v1581
        %v1583 = vpop.f32.mrb[0].mxu0
        %1584 = vmatprep.mubr.f32.mxu0 %v1237
        %1585 = vmatmul.mubr.f32.gmra.mrb[0].mxu0 %v1236
        %v1586 = vpop.f32.mrb[0].mxu0
        %v1587 = vadd.f32 %v1442, %v1586
        %v1588 = vpop.f32.mrb[0].mxu0
        %1589 = vmatprep.mubr.f32.mxu0 %v1241
        %1590 = vmatmul.mubr.f32.gmra.mrb[0].mxu0 %v1240
        %v1591 = vpop.f32.mrb[0].mxu0
        %v1592 = vadd.f32 %v1447, %v1591
        %v1593 = vpop.f32.mrb[0].mxu0
        %1594 = vmatprep.mubr.f32.mxu0 %v1245
        %1595 = vmatmul.mubr.f32.gmra.mrb[0].mxu0 %v1244
        %v1596 = vpop.f32.mrb[0].mxu0
        %v1597 = vadd.f32 %v1452, %v1596
        %v1598 = vpop.f32.mrb[0].mxu0
        %1599 = vmatprep.mubr.f32.mxu0 %v1249
        %1600 = vmatmul.mubr.f32.gmra.mrb[0].mxu0 %v1248
        %v1601 = vpop.f32.mrb[0].mxu0
        %v1602 = vadd.f32 %v1457, %v1601
        %v1603 = vpop.f32.mrb[0].mxu0
        %1604 = vmatprep.mubr.f32.mxu0 %v1253
        %1605 = vmatmul.mubr.f32.gmra.mrb[0].mxu0 %v1252
        %v1606 = vpop.f32.mrb[0].mxu0
        %v1607 = vadd.f32 %v1462, %v1606
        %v1608 = vpop.f32.mrb[0].mxu0
        %1609 = vmatprep.mubr.f32.mxu0 %v1257
        %1610 = vmatmul.mubr.f32.gmra.mrb[0].mxu0 %v1256
        %v1611 = vpop.f32.mrb[0].mxu0
        %v1612 = vadd.f32 %v1467, %v1611
        %v1613 = vpop.f32.mrb[0].mxu0
        %1614 = vmatprep.mubr.f32.mxu0 %v1261
        %1615 = vmatmul.mubr.f32.gmra.mrb[0].mxu0 %v1260
        %v1616 = vpop.f32.mrb[0].mxu0
        %v1617 = vadd.f32 %v1472, %v1616
        %v1618 = vpop.f32.mrb[0].mxu0
        %1619 = vmatprep.mubr.f32.mxu0 %v1265
        %1620 = vmatmul.mubr.f32.gmra.mrb[0].mxu0 %v1264
        %v1621 = vpop.f32.mrb[0].mxu0
        %v1622 = vadd.f32 %v1477, %v1621
        %v1623 = vpop.f32.mrb[0].mxu0
        %1624 = vmatprep.mubr.f32.mxu0 %v1269
        %1625 = vmatmul.mubr.f32.gmra.mrb[0].mxu0 %v1268
        %v1626 = vpop.f32.mrb[0].mxu0
        %v1627 = vadd.f32 %v1482, %v1626
        %v1628 = vpop.f32.mrb[0].mxu0
        %1629 = vmatprep.mubr.f32.mxu0 %v1273
        %1630 = vmatmul.mubr.f32.gmra.mrb[0].mxu0 %v1272
        %v1631 = vpop.f32.mrb[0].mxu0
        %v1632 = vadd.f32 %v1487, %v1631
        %v1633 = vpop.f32.mrb[0].mxu0
        %1634 = vdwg.mxu0
        %1635 = vst [vmem:[%s271] sm:$0xff] %v1557
        %1636 = vst [vmem:[%s271 + $0x8] sm:$0xff] %v1562
        %1637 = vst [vmem:[%s271 + $0x10] sm:$0xff] %v1567
        %1638 = vst [vmem:[%s271 + $0x18] sm:$0xff] %v1572
        %1639 = vst [vmem:[%s271 + $0x20] sm:$0xff] %v1577
        %1640 = vst [vmem:[%s271 + $0x28] sm:$0xff] %v1582
        %1641 = vst [vmem:[%s271 + $0x30] sm:$0xff] %v1587
        %1642 = vst [vmem:[%s271 + $0x38] sm:$0xff] %v1592
        %1643 = vst [vmem:[%s271 + $0x40] sm:$0xff] %v1597
        %1644 = vst [vmem:[%s271 + $0x48] sm:$0xff] %v1602
        %1645 = vst [vmem:[%s271 + $0x50] sm:$0xff] %v1607
        %1646 = vst [vmem:[%s271 + $0x58] sm:$0xff] %v1612
        %1647 = vst [vmem:[%s271 + $0x60] sm:$0xff] %v1617
        %1648 = vst [vmem:[%s271 + $0x68] sm:$0xff] %v1622
        %1649 = vst [vmem:[%s271 + $0x70] sm:$0xff] %v1627
        %1650 = vst [vmem:[%s271 + $0x78] sm:$0xff] %v1632
        %s1651 = sand.u32 %s141, 1
        %s1652 = scalar_lea.sflag [#allocation4], %s1651
        %s1653 = sand.u32 %s141, 1
        %s1654 = smul.addr %s1653, 128
        %s1655 = scalar_lea.vmem [#allocation8], %s1654
        // Predicated region
        $region53: #{tpu_custom_call.1} parent=39 // pred_check
          %p1656 = pneg %p151
        $region54: #{tpu_custom_call.1} parent=39 // pred_check_branch
          %1658 = sbr.rel (%p1656) target = $region56
        $region55: #{tpu_custom_call.1} parent=39 // pred_region
          %s1659 = smul.u32 16, %s23
          %s1661 = ssub.s32 2048, 2048
          %1662 = vsyncadd %s1652, %s1661
          %s1663 = smul.addr %s1659, 128
          %s1664 = scalar_lea.hbm %s5, %s1663
          %s1665 = sshll.u32 %s1655, 4
          %s1666 = int_to_ptr.vmem [resolvable:$true] %s1665
          %1671 = dma.vmem_to_hbm [thread:$0]  %s1666, 2048, %s1664, %s1652, 128, 128, 8
        $region56: #{tpu_custom_call.1} parent=39 // pred_fallthru
          _
      $region40: #{tpu_custom_call.1} parent=5 // pred_fallthru
        _
      %p1672 = scmp.le.s32.totalorder 2, %s18
      // Predicated region
      $region57: #{tpu_custom_call.1} parent=5 // pred_check
        %p1673 = pneg %p1672
      $region58: #{tpu_custom_call.1} parent=5 // pred_check_branch
        %1675 = sbr.rel (%p1673) target = $region60
      $region59: #{tpu_custom_call.1} parent=5 // pred_region
        %s1676 = ssub.s32 %s18, 2
        // Predicated region
        $region61: #{tpu_custom_call.1} parent=59 // pred_check
          %p1677 = pneg %p157
        $region62: #{tpu_custom_call.1} parent=59 // pred_check_branch
          %1679 = sbr.rel (%p1677) target = $region64
        $region63: #{tpu_custom_call.1} parent=59 // pred_region
          %s1680 = sand.u32 %s142, 1
          %s1681 = scalar_lea.sflag [#allocation4], %s1680
          %s1682 = sand.u32 %s142, 1
          %s1683 = smul.addr %s1682, 128
          %s1684 = scalar_lea.vmem [#allocation8], %s1683
          %1685 = dma.done %s1681, 2048
        $region64: #{tpu_custom_call.1} parent=59 // pred_fallthru
          _
      $region60: #{tpu_custom_call.1} parent=5 // pred_fallthru
        _
    $region6: #{tpu_custom_call.1} parent=1 // loop_footer
      %s22 = sadd.s32 1, %s18
    $region7: #{tpu_custom_call.1} parent=1 // loop_footer_branch
      %17 = sbr.rel target = $region3
    $region8: #{tpu_custom_call.1} parent=1 // loop_exit
      _
    %1686 = vsyncpa [#allocation3], 1
    %s1687 = scalar_lea.sflag [#allocation3], 1
    %1688 = vsyncpa %s1687, 1
    %1689 = vsyncpa [#allocation6], 1
    %1690 = vsyncpa [#allocation4], 1
    %s1691 = scalar_lea.sflag [#allocation4], 1
    %1692 = vsyncpa %s1691, 1

</llo_original>
